<compile_context>
chip_gen: v5e
topology: v5e:2x2
jax: 0.10.0
libtpu: 0.0.40
codegen_flags: <defaults>
</compile_context>

<pallas_src>
import functools

import jax
import jax.numpy as jnp
from jax import lax
from jax.experimental import pallas as pl
from jax.experimental.pallas import tpu as pltpu

ATOM_DIMS = [119, 4, 12, 12, 10, 6, 6, 2, 2]
BOND_DIMS = [5, 6, 2]
BN_EPS = 1e-5
LANE = 128
SUBLANE = 8


def _round_up(x, m):
    return (x + m - 1) // m * m


def _pad2(a, rows, cols):
    return jnp.pad(a, ((0, rows - a.shape[0]), (0, cols - a.shape[1])))


# ----------------------------------------------------------------------------
# Fused kernel: every GIN layer (message+aggregate+MLP+BN[+ReLU]) in one call.
# ----------------------------------------------------------------------------
def fused_gin_kernel(x_ref, src_ref, dst_ref, ee_ref, eps_ref,
                     w1_ref, b1_ref, g1_ref, be1_ref,
                     w2_ref, b2_ref, g2_ref, be2_ref,
                     out_ref,
                     h_ref, src_oh_ref, dst_oh_ref,
                     *, n_real):
    l = pl.program_id(0)
    last = pl.num_programs(0) - 1
    e_pad, n_pad = src_oh_ref.shape

    # One-time setup at layer 0: seed h with the atom-encoded features and
    # build the bf16 one-hot gather/scatter operands on-chip from the integer
    # edge endpoints (padded edges carry -1 -> all-zero rows -> no effect).
    @pl.when(l == 0)
    def _init():
        h_ref[...] = x_ref[...]
        src_oh_ref[...] = (
            lax.broadcasted_iota(jnp.int32, (e_pad, n_pad), 1) == src_ref[...]
        ).astype(jnp.bfloat16)                                   # [E_pad, N_pad]
        dst_oh_ref[...] = (
            lax.broadcasted_iota(jnp.int32, (n_pad, e_pad), 0) == dst_ref[...]
        ).astype(jnp.bfloat16)                                   # [N_pad, E_pad]

    h = h_ref[...]                                               # [N_pad, D_pad] f32

    # --- message passing on the MXU: bf16 operands, f32 accumulation --------
    xj = jnp.dot(src_oh_ref[...], h.astype(jnp.bfloat16),
                 preferred_element_type=jnp.float32)             # x_j = x[src]
    msg = jnp.maximum(xj + ee_ref[0], 0.0)                       # relu(x_j + e_emb)
    agg = jnp.dot(dst_oh_ref[...], msg.astype(jnp.bfloat16),
                  preferred_element_type=jnp.float32)            # scatter-add @ dst

    hin = eps_ref[0] * h + agg                                   # (1 + eps)*x + agg

    # BatchNorm (training-mode batch statistics) over the *real* node rows.
    if n_pad == n_real:
        row_mask = None
    else:
        row_mask = (lax.broadcasted_iota(jnp.int32, (n_pad, 1), 0)
                    < n_real).astype(jnp.float32)
    inv_n = 1.0 / float(n_real)

    def batch_norm(z, gamma, beta):
        zm = z if row_mask is None else z * row_mask
        mean = jnp.sum(zm, axis=0, keepdims=True) * inv_n
        ex2 = jnp.sum(zm * zm, axis=0, keepdims=True) * inv_n
        var = ex2 - mean * mean                                  # one-pass, biased
        return (z - mean) * lax.rsqrt(var + BN_EPS) * gamma + beta

    # --- GIN MLP: Linear -> BatchNorm -> ReLU -> Linear (bf16 MXU, f32 VPU) --
    z = jnp.dot(hin.astype(jnp.bfloat16), w1_ref[0],
                preferred_element_type=jnp.float32) + b1_ref[0]
    z = jnp.maximum(batch_norm(z, g1_ref[0], be1_ref[0]), 0.0)
    z = jnp.dot(z.astype(jnp.bfloat16), w2_ref[0],
                preferred_element_type=jnp.float32) + b2_ref[0]

    # --- outer GNN BatchNorm ------------------------------------------------
    z = batch_norm(z, g2_ref[0], be2_ref[0])
    # TODO(synk): dropout is identity at drop_ratio=0.0, so omitted.

    @pl.when(l != last)          # ReLU between layers, carried in VMEM
    def _carry():
        h_ref[...] = jnp.maximum(z, 0.0)

    @pl.when(l == last)          # last layer: no ReLU; write the output once
    def _finalize():
        out_ref[...] = z


def fused_gin_forward(h0_pad, src_ids, dst_ids, packed, *, n_real):
    num_layer, d_pad, h_pad = packed["w1"].shape
    n_pad = h0_pad.shape[0]
    e_pad = src_ids.shape[0]

    kernel = functools.partial(fused_gin_kernel, n_real=n_real)

    const = lambda l: (0, 0)          # DMA'd once, stays resident
    per_layer = lambda l: (l, 0, 0)   # streamed / double-buffered per layer

    operands = (h0_pad, src_ids, dst_ids, packed["ee"], packed["eps"],
                packed["w1"], packed["b1"], packed["bn1_g"], packed["bn1_b"],
                packed["w2"], packed["b2"], packed["bn2_g"], packed["bn2_b"])
    flops = 2 * num_layer * (2 * e_pad * n_pad * d_pad
                             + 2 * n_pad * d_pad * h_pad)
    bytes_accessed = int(sum(a.size * a.dtype.itemsize for a in operands)
                         + n_pad * d_pad * 4)
    cost = pl.CostEstimate(flops=flops,
                           transcendentals=num_layer * (h_pad + d_pad),
                           bytes_accessed=bytes_accessed)

    grid_spec = pltpu.PrefetchScalarGridSpec(
        num_scalar_prefetch=0,
        grid=(num_layer,),
        in_specs=[
            pl.BlockSpec((n_pad, d_pad), const),            # atom-encoded x
            pl.BlockSpec((e_pad, 1), const),                # src node ids
            pl.BlockSpec((1, e_pad), const),                # dst node ids
            pl.BlockSpec((1, e_pad, d_pad), per_layer),     # bond embeddings
            pl.BlockSpec((1, 1, d_pad), per_layer),         # 1 + eps
            pl.BlockSpec((1, d_pad, h_pad), per_layer),     # w1 (bf16)
            pl.BlockSpec((1, 1, h_pad), per_layer),         # b1
            pl.BlockSpec((1, 1, h_pad), per_layer),         # bn1 gamma
            pl.BlockSpec((1, 1, h_pad), per_layer),         # bn1 beta
            pl.BlockSpec((1, h_pad, d_pad), per_layer),     # w2 (bf16)
            pl.BlockSpec((1, 1, d_pad), per_layer),         # b2
            pl.BlockSpec((1, 1, d_pad), per_layer),         # bn2 gamma
            pl.BlockSpec((1, 1, d_pad), per_layer),         # bn2 beta
        ],
        out_specs=pl.BlockSpec((n_pad, d_pad), const),
        scratch_shapes=[
            pltpu.VMEM((n_pad, d_pad), jnp.float32),        # carried activation
            pltpu.VMEM((e_pad, n_pad), jnp.bfloat16),       # src one-hot (gather)
            pltpu.VMEM((n_pad, e_pad), jnp.bfloat16),       # dst one-hot (scatter)
        ],
    )
    return pl.pallas_call(
        kernel,
        out_shape=jax.ShapeDtypeStruct((n_pad, d_pad), jnp.float32),
        grid_spec=grid_spec,
        compiler_params=pltpu.CompilerParams(
            dimension_semantics=("arbitrary",),   # layer axis carries state
            vmem_limit_bytes=32 * 1024 * 1024),
        cost_estimate=cost,
    )(*operands)


# ----------------------------------------------------------------------------
# Parameter init (shapes follow the PyTorch module) + packing for the kernel
# ----------------------------------------------------------------------------
def xavier_uniform(key, shape):
    fan_in, fan_out = shape
    a = (6.0 / (fan_in + fan_out)) ** 0.5
    return jax.random.uniform(key, shape, jnp.float32, -a, a)


def linear_init(key, fan_in, fan_out):
    kw, kb = jax.random.split(key)
    a = 1.0 / (fan_in ** 0.5)
    w = jax.random.uniform(kw, (fan_in, fan_out), jnp.float32, -a, a)
    b = jax.random.uniform(kb, (1, fan_out), jnp.float32, -a, a)
    return w, b


def init_params(key, num_layer, emb_dim):
    keys = jax.random.split(key, 4 + num_layer)
    atom_keys = jax.random.split(keys[0], len(ATOM_DIMS))
    atom_tables = [xavier_uniform(atom_keys[i], (ATOM_DIMS[i], emb_dim))
                   for i in range(len(ATOM_DIMS))]
    layers = []
    for l in range(num_layer):
        lk = jax.random.split(keys[4 + l], 8)
        bond_tables = [xavier_uniform(lk[i], (BOND_DIMS[i], emb_dim))
                       for i in range(len(BOND_DIMS))]
        w1, b1 = linear_init(lk[3], emb_dim, 2 * emb_dim)
        w2, b2 = linear_init(lk[4], 2 * emb_dim, emb_dim)
        layers.append(dict(
            bond_tables=bond_tables,
            one_plus_eps=jnp.float32(1.0),          # eps parameter init = 0
            w1=w1, b1=b1,
            bn1_g=jnp.ones((1, 2 * emb_dim), jnp.float32),
            bn1_b=jnp.zeros((1, 2 * emb_dim), jnp.float32),
            w2=w2, b2=b2,
            bn2_g=jnp.ones((1, emb_dim), jnp.float32),
            bn2_b=jnp.zeros((1, emb_dim), jnp.float32),
        ))
    return atom_tables, layers


def pack_params(layer_params, edge_attr, d_pad, h_pad, e_pad):
    ee, eps = [], []
    cols = {k: [] for k in
            ("w1", "b1", "bn1_g", "bn1_b", "w2", "b2", "bn2_g", "bn2_b")}
    for p in layer_params:
        # BondEncoder: sum of tiny embedding-table gathers (plain-JAX glue).
        e_emb = sum(p["bond_tables"][i][edge_attr[:, i]]
                    for i in range(edge_attr.shape[1])).astype(jnp.float32)
        ee.append(_pad2(e_emb, e_pad, d_pad))
        eps.append(jnp.full((1, d_pad), p["one_plus_eps"], jnp.float32))
        cols["w1"].append(_pad2(p["w1"], d_pad, h_pad).astype(jnp.bfloat16))
        cols["b1"].append(_pad2(p["b1"], 1, h_pad))
        cols["bn1_g"].append(_pad2(p["bn1_g"], 1, h_pad))
        cols["bn1_b"].append(_pad2(p["bn1_b"], 1, h_pad))
        cols["w2"].append(_pad2(p["w2"], h_pad, d_pad).astype(jnp.bfloat16))
        cols["b2"].append(_pad2(p["b2"], 1, d_pad))
        cols["bn2_g"].append(_pad2(p["bn2_g"], 1, d_pad))
        cols["bn2_b"].append(_pad2(p["bn2_b"], 1, d_pad))
    packed = {k: jnp.stack(v, axis=0) for k, v in cols.items()}
    packed["ee"] = jnp.stack(ee, axis=0)
    packed["eps"] = jnp.stack(eps, axis=0)
    return packed


# ----------------------------------------------------------------------------
# GNN forward (gnn_type='gin', JK='last', drop_ratio=0.0)
# ----------------------------------------------------------------------------
def gnn_forward(atom_tables, layer_params, x_feat, edge_index, edge_attr,
                num_layer, emb_dim):
    n = x_feat.shape[0]
    e = edge_index.shape[1]
    d_pad = _round_up(emb_dim, LANE)
    h_pad = _round_up(2 * emb_dim, LANE)
    n_pad = _round_up(n, SUBLANE)
    e_pad = _round_up(e, LANE)

    # AtomEncoder: sum of tiny embedding-table gathers (plain-JAX glue).
    h0 = sum(atom_tables[i][x_feat[:, i]] for i in range(x_feat.shape[1]))
    h0 = _pad2(h0.astype(jnp.float32), n_pad, d_pad)

    # edge endpoints; padded edges get -1 so they never match any node id.
    src = jnp.pad(edge_index[0].astype(jnp.int32), (0, e_pad - e),
                  constant_values=-1).reshape(e_pad, 1)
    dst = jnp.pad(edge_index[1].astype(jnp.int32), (0, e_pad - e),
                  constant_values=-1).reshape(1, e_pad)

    packed = pack_params(layer_params, edge_attr, d_pad, h_pad, e_pad)
    out = fused_gin_forward(h0, src, dst, packed, n_real=n)
    return out[:n, :emb_dim]                         # drop padding; JK='last'


# ----------------------------------------------------------------------------
# Pure-JAX references.  mp_dtype controls the matmul operand precision so the
# kernel's bf16-MXU path can be checked tightly; mp_dtype=float32 is the exact
# module semantics (loose sanity bound covers the bf16 mixed-precision drift).
# ----------------------------------------------------------------------------
def gnn_reference(atom_tables, layer_params, x_feat, edge_index, edge_attr,
                  num_layer, mp_dtype=jnp.float32):
    hi = lax.Precision.HIGHEST
    n = x_feat.shape[0]
    h = sum(atom_tables[i][x_feat[:, i]] for i in range(x_feat.shape[1]))
    h = h.astype(jnp.float32)
    gmat = jax.nn.one_hot(edge_index[0], n, dtype=mp_dtype)        # [E, N]
    smat = jax.nn.one_hot(edge_index[1], n, dtype=mp_dtype).T      # [N, E]
    for layer in range(num_layer):
        p = layer_params[layer]
        ee = sum(p["bond_tables"][i][edge_attr[:, i]]
                 for i in range(edge_attr.shape[1])).astype(jnp.float32)
        xj = jnp.dot(gmat, h.astype(mp_dtype),
                     preferred_element_type=jnp.float32, precision=hi)
        msg = jnp.maximum(xj + ee, 0.0)
        agg = jnp.dot(smat, msg.astype(mp_dtype),
                      preferred_element_type=jnp.float32, precision=hi)
        hin = p["one_plus_eps"] * h + agg
        z = jnp.dot(hin.astype(mp_dtype), p["w1"].astype(mp_dtype),
                    preferred_element_type=jnp.float32, precision=hi) + p["b1"]
        mu, var = jnp.mean(z, 0, keepdims=True), jnp.var(z, 0, keepdims=True)
        z = (z - mu) / jnp.sqrt(var + BN_EPS) * p["bn1_g"] + p["bn1_b"]
        z = jnp.maximum(z, 0.0)
        z = jnp.dot(z.astype(mp_dtype), p["w2"].astype(mp_dtype),
                    preferred_element_type=jnp.float32, precision=hi) + p["b2"]
        mu, var = jnp.mean(z, 0, keepdims=True), jnp.var(z, 0, keepdims=True)
        z = (z - mu) / jnp.sqrt(var + BN_EPS) * p["bn2_g"] + p["bn2_b"]
        h = jnp.maximum(z, 0.0) if layer != num_layer - 1 else z
    return h


if __name__ == "__main__":
    N, E, EMB_DIM, NUM_LAYER = 16, 32, 32, 2

    key = jax.random.PRNGKey(0)
    kp, kx, ke, ki = jax.random.split(key, 4)

    atom_tables, layer_params = init_params(kp, NUM_LAYER, EMB_DIM)

    xks = jax.random.split(kx, len(ATOM_DIMS))
    x_feat = jnp.stack(
        [jax.random.randint(xks[i], (N,), 0, ATOM_DIMS[i])
         for i in range(len(ATOM_DIMS))], axis=1)                 # [N, 9] int32
    eks = jax.random.split(ke, len(BOND_DIMS))
    edge_attr = jnp.stack(
        [jax.random.randint(eks[i], (E,), 0, BOND_DIMS[i])
         for i in range(len(BOND_DIMS))], axis=1)                 # [E, 3] int32
    edge_index = jax.random.randint(ki, (2, E), 0, N)             # [2, E] int32

    out = gnn_forward(atom_tables, layer_params, x_feat, edge_index,
                      edge_attr, NUM_LAYER, EMB_DIM)
    out = jax.block_until_ready(out)
    assert out.shape == (N, EMB_DIM)

    # Tight check against a reference with matching bf16 MXU-operand numerics.
    ref_bf16 = gnn_reference(atom_tables, layer_params, x_feat, edge_index,
                             edge_attr, NUM_LAYER, mp_dtype=jnp.bfloat16)
    assert jnp.allclose(out, ref_bf16, atol=1e-2, rtol=1e-2), \
        float(jnp.max(jnp.abs(out - ref_bf16)))

    # Loose sanity bound vs. exact f32 module semantics (covers bf16 drift).
    ref_f32 = gnn_reference(atom_tables, layer_params, x_feat, edge_index,
                            edge_attr, NUM_LAYER, mp_dtype=jnp.float32)
    rel = float(jnp.linalg.norm(out - ref_f32) / jnp.linalg.norm(ref_f32))
    assert rel < 0.1, rel

    print("KERNEL_OK")
</pallas_src>

<mosaic_0001>
module attributes {stable_mosaic.version = 11 : i64} {
  func.func @fused_gin_kernel(%arg0: i32, %arg1: memref<16x128xf32, #tpu.memory_space<vmem>>, %arg2: memref<128x1xi32, #tpu.memory_space<vmem>>, %arg3: memref<1x128xi32, #tpu.memory_space<vmem>>, %arg4: memref<1x128x128xf32, #tpu.memory_space<vmem>>, %arg5: memref<1x1x128xf32, #tpu.memory_space<vmem>>, %arg6: memref<1x128x128xbf16, #tpu.memory_space<vmem>>, %arg7: memref<1x1x128xf32, #tpu.memory_space<vmem>>, %arg8: memref<1x1x128xf32, #tpu.memory_space<vmem>>, %arg9: memref<1x1x128xf32, #tpu.memory_space<vmem>>, %arg10: memref<1x128x128xbf16, #tpu.memory_space<vmem>>, %arg11: memref<1x1x128xf32, #tpu.memory_space<vmem>>, %arg12: memref<1x1x128xf32, #tpu.memory_space<vmem>>, %arg13: memref<1x1x128xf32, #tpu.memory_space<vmem>>, %arg14: memref<16x128xf32, #tpu.memory_space<vmem>>, %arg15: memref<16x128xf32, #tpu.memory_space<vmem>>, %arg16: memref<128x16xbf16, #tpu.memory_space<vmem>>, %arg17: memref<16x128xbf16, #tpu.memory_space<vmem>>) attributes {dimension_semantics = [#tpu.dimension_semantics<arbitrary>], iteration_bounds = array<i64: 2>, scalar_prefetch = 0 : i64, scratch_operands = 3 : i64, tpu.core_type = #tpu.core_type<tc>, window_params = [{pipeline_mode = #tpu.pipeline_mode<synchronous>, transform_indices = @transform_0, window_bounds = array<i64: 16, 128>}, {pipeline_mode = #tpu.pipeline_mode<synchronous>, transform_indices = @transform_1, window_bounds = array<i64: 128, 1>}, {pipeline_mode = #tpu.pipeline_mode<synchronous>, transform_indices = @transform_2, window_bounds = array<i64: 1, 128>}, {transform_indices = @transform_3, window_bounds = array<i64: 1, 128, 128>}, {transform_indices = @transform_4, window_bounds = array<i64: 1, 1, 128>}, {transform_indices = @transform_5, window_bounds = array<i64: 1, 128, 128>}, {transform_indices = @transform_6, window_bounds = array<i64: 1, 1, 128>}, {transform_indices = @transform_7, window_bounds = array<i64: 1, 1, 128>}, {transform_indices = @transform_8, window_bounds = array<i64: 1, 1, 128>}, {transform_indices = @transform_9, window_bounds = array<i64: 1, 128, 128>}, {transform_indices = @transform_10, window_bounds = array<i64: 1, 1, 128>}, {transform_indices = @transform_11, window_bounds = array<i64: 1, 1, 128>}, {transform_indices = @transform_12, window_bounds = array<i64: 1, 1, 128>}, {pipeline_mode = #tpu.pipeline_mode<synchronous>, transform_indices = @transform_13, window_bounds = array<i64: 16, 128>}]} {
    %c0_i32 = arith.constant 0 : i32
    %0 = arith.cmpi eq, %arg0, %c0_i32 : i32
    %1 = arith.extui %0 : i1 to i32
    %c0_i32_0 = arith.constant 0 : i32
    %2 = arith.cmpi ne, %1, %c0_i32_0 : i32
    scf.if %2 {
      %c0_54 = arith.constant 0 : index
      %c0_55 = arith.constant 0 : index
      %96 = vector.load %arg1[%c0_54, %c0_55] : memref<16x128xf32, #tpu.memory_space<vmem>>, vector<16x128xf32>
      %c0_56 = arith.constant 0 : index
      %c0_57 = arith.constant 0 : index
      %97 = vector.load %arg15[%c0_56, %c0_57] : memref<16x128xf32, #tpu.memory_space<vmem>>, vector<16x128xf32>
      tpu.vector_store %arg15[%c0_56, %c0_57], %96 {strides = array<i32>} : memref<16x128xf32, #tpu.memory_space<vmem>>, vector<16x128xf32>,
      %98 = tpu.iota {dimensions = array<i32: 1>} : vector<128x16xi32>
      %c0_58 = arith.constant 0 : index
      %c0_59 = arith.constant 0 : index
      %99 = vector.load %arg2[%c0_58, %c0_59] : memref<128x1xi32, #tpu.memory_space<vmem>>, vector<128x1xi32>
      %100 = vector.broadcast %99 : vector<128x1xi32> to vector<128x16xi32>
      %101 = arith.cmpi eq, %98, %100 : vector<128x16xi32>
      %102 = arith.extui %101 : vector<128x16xi1> to vector<128x16xi32>
      %103 = arith.sitofp %102 : vector<128x16xi32> to vector<128x16xf32>
      %104 = arith.truncf %103 : vector<128x16xf32> to vector<128x16xbf16>
      %c0_60 = arith.constant 0 : index
      %c0_61 = arith.constant 0 : index
      %105 = vector.load %arg16[%c0_60, %c0_61] : memref<128x16xbf16, #tpu.memory_space<vmem>>, vector<128x16xbf16>
      tpu.vector_store %arg16[%c0_60, %c0_61], %104 {strides = array<i32>} : memref<128x16xbf16, #tpu.memory_space<vmem>>, vector<128x16xbf16>,
      %106 = tpu.iota {dimensions = array<i32: 0>} : vector<16x128xi32>
      %c0_62 = arith.constant 0 : index
      %c0_63 = arith.constant 0 : index
      %107 = vector.load %arg3[%c0_62, %c0_63] : memref<1x128xi32, #tpu.memory_space<vmem>>, vector<1x128xi32>
      %108 = vector.broadcast %107 : vector<1x128xi32> to vector<16x128xi32>
      %109 = arith.cmpi eq, %106, %108 : vector<16x128xi32>
      %110 = arith.extui %109 : vector<16x128xi1> to vector<16x128xi32>
      %111 = arith.sitofp %110 : vector<16x128xi32> to vector<16x128xf32>
      %112 = arith.truncf %111 : vector<16x128xf32> to vector<16x128xbf16>
      %c0_64 = arith.constant 0 : index
      %c0_65 = arith.constant 0 : index
      %113 = vector.load %arg17[%c0_64, %c0_65] : memref<16x128xbf16, #tpu.memory_space<vmem>>, vector<16x128xbf16>
      tpu.vector_store %arg17[%c0_64, %c0_65], %112 {strides = array<i32>} : memref<16x128xbf16, #tpu.memory_space<vmem>>, vector<16x128xbf16>,
    } else {
    }
    %c0 = arith.constant 0 : index
    %c0_1 = arith.constant 0 : index
    %3 = vector.load %arg15[%c0, %c0_1] : memref<16x128xf32, #tpu.memory_space<vmem>>, vector<16x128xf32>
    %c0_2 = arith.constant 0 : index
    %c0_3 = arith.constant 0 : index
    %4 = vector.load %arg16[%c0_2, %c0_3] : memref<128x16xbf16, #tpu.memory_space<vmem>>, vector<128x16xbf16>
    %5 = arith.truncf %3 : vector<16x128xf32> to vector<16x128xbf16>
    %cst = arith.constant dense<0.000000e+00> : vector<128x128xf32>
    %6 = tpu.matmul %4, %5, %cst {dimension_numbers = #tpu.dot_dimension_numbers<[1], [0], [0], [1], [0, 0, 1, 1], [], []>} : vector<128x16xbf16>, vector<16x128xbf16>, vector<128x128xf32> -> vector<128x128xf32>
    %c0_4 = arith.constant 0 : index
    %c0_5 = arith.constant 0 : index
    %c0_6 = arith.constant 0 : index
    %7 = vector.load %arg4[%c0_4, %c0_5, %c0_6] : memref<1x128x128xf32, #tpu.memory_space<vmem>>, vector<1x128x128xf32>
    %8 = vector.shape_cast %7 : vector<1x128x128xf32> to vector<128x128xf32>
    %9 = arith.addf %6, %8 : vector<128x128xf32>
    %cst_7 = arith.constant 0.000000e+00 : f32
    %10 = vector.broadcast %cst_7 : f32 to vector<128x128xf32>
    %11 = arith.maximumf %9, %10 : vector<128x128xf32>
    %c0_8 = arith.constant 0 : index
    %c0_9 = arith.constant 0 : index
    %12 = vector.load %arg17[%c0_8, %c0_9] : memref<16x128xbf16, #tpu.memory_space<vmem>>, vector<16x128xbf16>
    %13 = arith.truncf %11 : vector<128x128xf32> to vector<128x128xbf16>
    %cst_10 = arith.constant dense<0.000000e+00> : vector<16x128xf32>
    %14 = tpu.matmul %12, %13, %cst_10 {dimension_numbers = #tpu.dot_dimension_numbers<[1], [0], [0], [1], [0, 0, 1, 1], [], []>} : vector<16x128xbf16>, vector<128x128xbf16>, vector<16x128xf32> -> vector<16x128xf32>
    %c0_11 = arith.constant 0 : index
    %c0_12 = arith.constant 0 : index
    %c0_13 = arith.constant 0 : index
    %15 = vector.load %arg5[%c0_11, %c0_12, %c0_13] : memref<1x1x128xf32, #tpu.memory_space<vmem>>, vector<1x1x128xf32>
    %16 = vector.shape_cast %15 : vector<1x1x128xf32> to vector<1x128xf32>
    %17 = vector.broadcast %16 : vector<1x128xf32> to vector<16x128xf32>
    %18 = arith.mulf %17, %3 : vector<16x128xf32>
    %19 = arith.addf %18, %14 : vector<16x128xf32>
    %20 = arith.truncf %19 : vector<16x128xf32> to vector<16x128xbf16>
    %c0_14 = arith.constant 0 : index
    %c0_15 = arith.constant 0 : index
    %c0_16 = arith.constant 0 : index
    %21 = vector.load %arg6[%c0_14, %c0_15, %c0_16] : memref<1x128x128xbf16, #tpu.memory_space<vmem>>, vector<1x128x128xbf16>
    %22 = vector.shape_cast %21 : vector<1x128x128xbf16> to vector<128x128xbf16>
    %cst_17 = arith.constant dense<0.000000e+00> : vector<16x128xf32>
    %23 = tpu.matmul %20, %22, %cst_17 {dimension_numbers = #tpu.dot_dimension_numbers<[1], [0], [0], [1], [0, 0, 1, 1], [], []>} : vector<16x128xbf16>, vector<128x128xbf16>, vector<16x128xf32> -> vector<16x128xf32>
    %c0_18 = arith.constant 0 : index
    %c0_19 = arith.constant 0 : index
    %c0_20 = arith.constant 0 : index
    %24 = vector.load %arg7[%c0_18, %c0_19, %c0_20] : memref<1x1x128xf32, #tpu.memory_space<vmem>>, vector<1x1x128xf32>
    %25 = vector.shape_cast %24 : vector<1x1x128xf32> to vector<1x128xf32>
    %26 = vector.broadcast %25 : vector<1x128xf32> to vector<16x128xf32>
    %27 = arith.addf %23, %26 : vector<16x128xf32>
    %c0_21 = arith.constant 0 : index
    %c0_22 = arith.constant 0 : index
    %c0_23 = arith.constant 0 : index
    %28 = vector.load %arg8[%c0_21, %c0_22, %c0_23] : memref<1x1x128xf32, #tpu.memory_space<vmem>>, vector<1x1x128xf32>
    %29 = vector.shape_cast %28 : vector<1x1x128xf32> to vector<1x128xf32>
    %c0_24 = arith.constant 0 : index
    %c0_25 = arith.constant 0 : index
    %c0_26 = arith.constant 0 : index
    %30 = vector.load %arg9[%c0_24, %c0_25, %c0_26] : memref<1x1x128xf32, #tpu.memory_space<vmem>>, vector<1x1x128xf32>
    %31 = vector.shape_cast %30 : vector<1x1x128xf32> to vector<1x128xf32>
    %cst_27 = arith.constant dense<0.000000e+00> : vector<128xf32>
    %32 = vector.multi_reduction <add>, %27, %cst_27 [0] : vector<16x128xf32> to vector<128xf32>
    %33 = vector.shape_cast %32 : vector<128xf32> to vector<1x128xf32>
    %cst_28 = arith.constant 6.250000e-02 : f32
    %34 = vector.broadcast %cst_28 : f32 to vector<1x128xf32>
    %35 = arith.mulf %33, %34 : vector<1x128xf32>
    %36 = arith.mulf %27, %27 : vector<16x128xf32>
    %cst_29 = arith.constant dense<0.000000e+00> : vector<128xf32>
    %37 = vector.multi_reduction <add>, %36, %cst_29 [0] : vector<16x128xf32> to vector<128xf32>
    %38 = vector.shape_cast %37 : vector<128xf32> to vector<1x128xf32>
    %cst_30 = arith.constant 6.250000e-02 : f32
    %39 = vector.broadcast %cst_30 : f32 to vector<1x128xf32>
    %40 = arith.mulf %38, %39 : vector<1x128xf32>
    %41 = arith.mulf %35, %35 : vector<1x128xf32>
    %42 = arith.subf %40, %41 : vector<1x128xf32>
    %43 = vector.broadcast %35 : vector<1x128xf32> to vector<16x128xf32>
    %44 = arith.subf %27, %43 : vector<16x128xf32>
    %cst_31 = arith.constant 9.99999974E-6 : f32
    %45 = vector.broadcast %cst_31 : f32 to vector<1x128xf32>
    %46 = arith.addf %42, %45 : vector<1x128xf32>
    %47 = math.rsqrt %46 : vector<1x128xf32>
    %48 = vector.broadcast %47 : vector<1x128xf32> to vector<16x128xf32>
    %49 = arith.mulf %44, %48 : vector<16x128xf32>
    %50 = vector.broadcast %29 : vector<1x128xf32> to vector<16x128xf32>
    %51 = arith.mulf %49, %50 : vector<16x128xf32>
    %52 = vector.broadcast %31 : vector<1x128xf32> to vector<16x128xf32>
    %53 = arith.addf %51, %52 : vector<16x128xf32>
    %cst_32 = arith.constant 0.000000e+00 : f32
    %54 = vector.broadcast %cst_32 : f32 to vector<16x128xf32>
    %55 = arith.maximumf %53, %54 : vector<16x128xf32>
    %56 = arith.truncf %55 : vector<16x128xf32> to vector<16x128xbf16>
    %c0_33 = arith.constant 0 : index
    %c0_34 = arith.constant 0 : index
    %c0_35 = arith.constant 0 : index
    %57 = vector.load %arg10[%c0_33, %c0_34, %c0_35] : memref<1x128x128xbf16, #tpu.memory_space<vmem>>, vector<1x128x128xbf16>
    %58 = vector.shape_cast %57 : vector<1x128x128xbf16> to vector<128x128xbf16>
    %cst_36 = arith.constant dense<0.000000e+00> : vector<16x128xf32>
    %59 = tpu.matmul %56, %58, %cst_36 {dimension_numbers = #tpu.dot_dimension_numbers<[1], [0], [0], [1], [0, 0, 1, 1], [], []>} : vector<16x128xbf16>, vector<128x128xbf16>, vector<16x128xf32> -> vector<16x128xf32>
    %c0_37 = arith.constant 0 : index
    %c0_38 = arith.constant 0 : index
    %c0_39 = arith.constant 0 : index
    %60 = vector.load %arg11[%c0_37, %c0_38, %c0_39] : memref<1x1x128xf32, #tpu.memory_space<vmem>>, vector<1x1x128xf32>
    %61 = vector.shape_cast %60 : vector<1x1x128xf32> to vector<1x128xf32>
    %62 = vector.broadcast %61 : vector<1x128xf32> to vector<16x128xf32>
    %63 = arith.addf %59, %62 : vector<16x128xf32>
    %c0_40 = arith.constant 0 : index
    %c0_41 = arith.constant 0 : index
    %c0_42 = arith.constant 0 : index
    %64 = vector.load %arg12[%c0_40, %c0_41, %c0_42] : memref<1x1x128xf32, #tpu.memory_space<vmem>>, vector<1x1x128xf32>
    %65 = vector.shape_cast %64 : vector<1x1x128xf32> to vector<1x128xf32>
    %c0_43 = arith.constant 0 : index
    %c0_44 = arith.constant 0 : index
    %c0_45 = arith.constant 0 : index
    %66 = vector.load %arg13[%c0_43, %c0_44, %c0_45] : memref<1x1x128xf32, #tpu.memory_space<vmem>>, vector<1x1x128xf32>
    %67 = vector.shape_cast %66 : vector<1x1x128xf32> to vector<1x128xf32>
    %cst_46 = arith.constant dense<0.000000e+00> : vector<128xf32>
    %68 = vector.multi_reduction <add>, %63, %cst_46 [0] : vector<16x128xf32> to vector<128xf32>
    %69 = vector.shape_cast %68 : vector<128xf32> to vector<1x128xf32>
    %cst_47 = arith.constant 6.250000e-02 : f32
    %70 = vector.broadcast %cst_47 : f32 to vector<1x128xf32>
    %71 = arith.mulf %69, %70 : vector<1x128xf32>
    %72 = arith.mulf %63, %63 : vector<16x128xf32>
    %cst_48 = arith.constant dense<0.000000e+00> : vector<128xf32>
    %73 = vector.multi_reduction <add>, %72, %cst_48 [0] : vector<16x128xf32> to vector<128xf32>
    %74 = vector.shape_cast %73 : vector<128xf32> to vector<1x128xf32>
    %cst_49 = arith.constant 6.250000e-02 : f32
    %75 = vector.broadcast %cst_49 : f32 to vector<1x128xf32>
    %76 = arith.mulf %74, %75 : vector<1x128xf32>
    %77 = arith.mulf %71, %71 : vector<1x128xf32>
    %78 = arith.subf %76, %77 : vector<1x128xf32>
    %79 = vector.broadcast %71 : vector<1x128xf32> to vector<16x128xf32>
    %80 = arith.subf %63, %79 : vector<16x128xf32>
    %cst_50 = arith.constant 9.99999974E-6 : f32
    %81 = vector.broadcast %cst_50 : f32 to vector<1x128xf32>
    %82 = arith.addf %78, %81 : vector<1x128xf32>
    %83 = math.rsqrt %82 : vector<1x128xf32>
    %84 = vector.broadcast %83 : vector<1x128xf32> to vector<16x128xf32>
    %85 = arith.mulf %80, %84 : vector<16x128xf32>
    %86 = vector.broadcast %65 : vector<1x128xf32> to vector<16x128xf32>
    %87 = arith.mulf %85, %86 : vector<16x128xf32>
    %88 = vector.broadcast %67 : vector<1x128xf32> to vector<16x128xf32>
    %89 = arith.addf %87, %88 : vector<16x128xf32>
    %c1_i32 = arith.constant 1 : i32
    %90 = arith.cmpi ne, %arg0, %c1_i32 : i32
    %91 = arith.extui %90 : i1 to i32
    %c0_i32_51 = arith.constant 0 : i32
    %92 = arith.cmpi ne, %91, %c0_i32_51 : i32
    scf.if %92 {
      %cst_54 = arith.constant 0.000000e+00 : f32
      %96 = vector.broadcast %cst_54 : f32 to vector<16x128xf32>
      %97 = arith.maximumf %89, %96 : vector<16x128xf32>
      %c0_55 = arith.constant 0 : index
      %c0_56 = arith.constant 0 : index
      %98 = vector.load %arg15[%c0_55, %c0_56] : memref<16x128xf32, #tpu.memory_space<vmem>>, vector<16x128xf32>
      tpu.vector_store %arg15[%c0_55, %c0_56], %97 {strides = array<i32>} : memref<16x128xf32, #tpu.memory_space<vmem>>, vector<16x128xf32>,
    } else {
    }
    %c1_i32_52 = arith.constant 1 : i32
    %93 = arith.cmpi eq, %arg0, %c1_i32_52 : i32
    %94 = arith.extui %93 : i1 to i32
    %c0_i32_53 = arith.constant 0 : i32
    %95 = arith.cmpi ne, %94, %c0_i32_53 : i32
    scf.if %95 {
      %c0_54 = arith.constant 0 : index
      %c0_55 = arith.constant 0 : index
      %96 = vector.load %arg14[%c0_54, %c0_55] : memref<16x128xf32, #tpu.memory_space<vmem>>, vector<16x128xf32>
      tpu.vector_store %arg14[%c0_54, %c0_55], %89 {strides = array<i32>} : memref<16x128xf32, #tpu.memory_space<vmem>>, vector<16x128xf32>,
    } else {
    }
    return
  }
  func.func @transform_0(%arg0: i32) -> (i32, i32) {
    %c0_i32 = arith.constant 0 : i32
    %c0_i32_0 = arith.constant 0 : i32
    %c0_i32_1 = arith.constant 0 : i32
    return %c0_i32, %c0_i32_0 : i32, i32
  }
  func.func @transform_1(%arg0: i32) -> (i32, i32) {
    %c0_i32 = arith.constant 0 : i32
    %c0_i32_0 = arith.constant 0 : i32
    %c0_i32_1 = arith.constant 0 : i32
    return %c0_i32, %c0_i32_0 : i32, i32
  }
  func.func @transform_2(%arg0: i32) -> (i32, i32) {
    %c0_i32 = arith.constant 0 : i32
    %c0_i32_0 = arith.constant 0 : i32
    %c0_i32_1 = arith.constant 0 : i32
    return %c0_i32, %c0_i32_0 : i32, i32
  }
  func.func @transform_3(%arg0: i32) -> (i32, i32, i32) {
    %c0_i32 = arith.constant 0 : i32
    %c0_i32_0 = arith.constant 0 : i32
    %c0_i32_1 = arith.constant 0 : i32
    return %arg0, %c0_i32, %c0_i32_0 : i32, i32, i32
  }
  func.func @transform_4(%arg0: i32) -> (i32, i32, i32) {
    %c0_i32 = arith.constant 0 : i32
    %c0_i32_0 = arith.constant 0 : i32
    %c0_i32_1 = arith.constant 0 : i32
    return %arg0, %c0_i32, %c0_i32_0 : i32, i32, i32
  }
  func.func @transform_5(%arg0: i32) -> (i32, i32, i32) {
    %c0_i32 = arith.constant 0 : i32
    %c0_i32_0 = arith.constant 0 : i32
    %c0_i32_1 = arith.constant 0 : i32
    return %arg0, %c0_i32, %c0_i32_0 : i32, i32, i32
  }
  func.func @transform_6(%arg0: i32) -> (i32, i32, i32) {
    %c0_i32 = arith.constant 0 : i32
    %c0_i32_0 = arith.constant 0 : i32
    %c0_i32_1 = arith.constant 0 : i32
    return %arg0, %c0_i32, %c0_i32_0 : i32, i32, i32
  }
  func.func @transform_7(%arg0: i32) -> (i32, i32, i32) {
    %c0_i32 = arith.constant 0 : i32
    %c0_i32_0 = arith.constant 0 : i32
    %c0_i32_1 = arith.constant 0 : i32
    return %arg0, %c0_i32, %c0_i32_0 : i32, i32, i32
  }
  func.func @transform_8(%arg0: i32) -> (i32, i32, i32) {
    %c0_i32 = arith.constant 0 : i32
    %c0_i32_0 = arith.constant 0 : i32
    %c0_i32_1 = arith.constant 0 : i32
    return %arg0, %c0_i32, %c0_i32_0 : i32, i32, i32
  }
  func.func @transform_9(%arg0: i32) -> (i32, i32, i32) {
    %c0_i32 = arith.constant 0 : i32
    %c0_i32_0 = arith.constant 0 : i32
    %c0_i32_1 = arith.constant 0 : i32
    return %arg0, %c0_i32, %c0_i32_0 : i32, i32, i32
  }
  func.func @transform_10(%arg0: i32) -> (i32, i32, i32) {
    %c0_i32 = arith.constant 0 : i32
    %c0_i32_0 = arith.constant 0 : i32
    %c0_i32_1 = arith.constant 0 : i32
    return %arg0, %c0_i32, %c0_i32_0 : i32, i32, i32
  }
  func.func @transform_11(%arg0: i32) -> (i32, i32, i32) {
    %c0_i32 = arith.constant 0 : i32
    %c0_i32_0 = arith.constant 0 : i32
    %c0_i32_1 = arith.constant 0 : i32
    return %arg0, %c0_i32, %c0_i32_0 : i32, i32, i32
  }
  func.func @transform_12(%arg0: i32) -> (i32, i32, i32) {
    %c0_i32 = arith.constant 0 : i32
    %c0_i32_0 = arith.constant 0 : i32
    %c0_i32_1 = arith.constant 0 : i32
    return %arg0, %c0_i32, %c0_i32_0 : i32, i32, i32
  }
  func.func @transform_13(%arg0: i32) -> (i32, i32) {
    %c0_i32 = arith.constant 0 : i32
    %c0_i32_0 = arith.constant 0 : i32
    %c0_i32_1 = arith.constant 0 : i32
    return %c0_i32, %c0_i32_0 : i32, i32
  }
}

</mosaic_0001>

<llo_original>
// kernel: tpu_custom_call.1
$region0: #{tpu_custom_call.1}
  #allocation0 [shape = 'u32[]', space=smem, size = 0x4, offset = 0x4, fixed_abs, tag = 'smem constant byte address 0x4 - core index']
  #allocation1 [shape = 'u32[72,128]{1,0:T(1,128)}', space=vmem, size = 0x9000, scoped, tag = 'internal scratch']
  #allocation2 [shape = 'f32[16,128]{1,0:T(8,128)}', space=vmem, size = 0x2000, scoped, tag = 'scratch operand']
  #allocation3 [shape = 'bf16[128,16]{1,0:T(8,128)(2,1)}', space=vmem, size = 0x8000, scoped, tag = 'scratch operand']
  #allocation4 [shape = 'bf16[16,128]{1,0:T(8,128)(2,1)}', space=vmem, size = 0x1000, scoped, tag = 'scratch operand']
  %s0 = inlined_call_operand.hbm [shape: f32[16,128], index: 0, kind: input, shape index: {}]
  %s1 = inlined_call_operand.vmem [shape: s32[128,1], index: 1, kind: input, shape index: {}]
  %s2 = inlined_call_operand.hbm [shape: s32[1,128], index: 2, kind: input, shape index: {}]
  %s3 = inlined_call_operand.hbm [shape: f32[2,128,128], index: 3, kind: input, shape index: {}]
  %s4 = inlined_call_operand.vmem [shape: f32[2,1,128], index: 4, kind: input, shape index: {}]
  %s5 = inlined_call_operand.vmem [shape: bf16[2,128,128], index: 5, kind: input, shape index: {}]
  %s6 = inlined_call_operand.vmem [shape: f32[2,1,128], index: 6, kind: input, shape index: {}]
  %s7 = inlined_call_operand.vmem [shape: f32[2,1,128], index: 7, kind: input, shape index: {}]
  %s8 = inlined_call_operand.vmem [shape: f32[2,1,128], index: 8, kind: input, shape index: {}]
  %s9 = inlined_call_operand.hbm [shape: bf16[2,128,128], index: 9, kind: input, shape index: {}]
  %s10 = inlined_call_operand.vmem [shape: f32[2,1,128], index: 10, kind: input, shape index: {}]
  %s11 = inlined_call_operand.hbm [shape: f32[2,1,128], index: 11, kind: input, shape index: {}]
  %s12 = inlined_call_operand.vmem [shape: f32[2,1,128], index: 12, kind: input, shape index: {}]
  %s13 = inlined_call_operand.hbm [shape: f32[16,128], index: 13, kind: output, shape index: {}]
  %s14 = sld [smem:[#allocation0]]
  $region117: #{tpu_custom_call.1} parent=0
    _
  %s16 = ssub.s32 1, %s14
  %s17 = scalar_select 0, %s16, %s14
  $region1: #{tpu_custom_call.1} parent=0
    #allocation5 [shape = 'u8[8192]{0}', space=vmem, size = 0x2000, scoped, tag = 'input window, operand 0, single buffered']
    #allocation6 [shape = 's32[2]{0}', space=sflag, size = 0x8, scoped, tag = 'scoped memory for tpu_custom_call.1']
    #allocation7 [shape = 's32[2]{0}', space=sflag, size = 0x8, scoped, tag = 'scoped memory for tpu_custom_call.1']
    #allocation8 [shape = 'u8[512]{0}', space=vmem, size = 0x400, scoped, tag = 'input window, operand 2, single buffered']
    #allocation9 [shape = 's32[1]{0}', space=sflag, size = 0x4, scoped, tag = 'scoped memory for tpu_custom_call.1']
    #allocation10 [shape = 'u8[131072]{0}', space=vmem, size = 0x20000, scoped, tag = 'input window, operand 3']
    #allocation11 [shape = 'u8[65536]{0}', space=vmem, size = 0x10000, scoped, tag = 'input window, operand 9']
    #allocation12 [shape = 'u8[1024]{0}', space=vmem, size = 0x400, scoped, tag = 'input window, operand 11']
    #allocation13 [shape = 'u8[8192]{0}', space=vmem, size = 0x2000, scoped, tag = 'output window, operand 0, single buffered']
    %18 = vsyncpa [#allocation6], 0
    %19 = vsyncpa [#allocation9], 0
    %20 = vsyncpa [#allocation7], 0
    loop: start=0, step=1, limit=4
    $region2: #{tpu_custom_call.1} parent=1 // loop_pre_header
      _
    $region3: #{tpu_custom_call.1} parent=1 // loop_header
      %s22 = sphi 0, %s26
      %p23 = scmp.ge.s32.totalorder %s22, 4
      %s30 = sphi 0, %s30
      %s32 = sphi 0, %s30
      %s33 = sphi 0, %s32
      %s47 = sphi 0, %s33
      %s51 = sphi 0, %s51
      %s53 = sphi 0, %s51
      %s54 = sphi 0, %s53
      %s68 = sphi 0, %s54
      %s72 = sphi 0, %s72
      %s74 = sphi 0, %s72
      %s75 = sphi 0, %s74
      %s89 = sphi 0, %s75
      %s95 = sphi 0, %s97
      %s98 = sphi 0, %s95
      %s99 = sphi 0, %s98
      %s115 = sphi 0, %s99
      %s121 = sphi 0, %s123
      %s124 = sphi 0, %s121
      %s125 = sphi 0, %s124
      %s141 = sphi 0, %s125
      %s147 = sphi 0, %s149
      %s150 = sphi 0, %s147
      %s151 = sphi 0, %s150
      %s167 = sphi 0, %s151
      %s173 = sphi 0, %s175
      %s176 = sphi 0, %s173
      %s177 = sphi 0, %s176
      %s193 = sphi 0, %s177
      %s199 = sphi 0, %s201
      %s202 = sphi 0, %s199
      %s203 = sphi 0, %s202
      %s219 = sphi 0, %s203
      %s225 = sphi 0, %s227
      %s228 = sphi 0, %s225
      %s229 = sphi 0, %s228
      %s245 = sphi 0, %s229
      %s251 = sphi 0, %s253
      %s254 = sphi 0, %s251
      %s255 = sphi 0, %s254
      %s271 = sphi 0, %s255
      %s277 = sphi 0, %s279
      %s280 = sphi 0, %s277
      %s281 = sphi 0, %s280
      %s297 = sphi 0, %s281
      %s303 = sphi 0, %s305
      %s306 = sphi 0, %s303
      %s307 = sphi 0, %s306
      %s323 = sphi 0, %s307
      %s329 = sphi 0, %s331
      %s332 = sphi 0, %s329
      %s333 = sphi 0, %s332
      %s349 = sphi 0, %s333
      %s353 = sphi 0, %s353
      %s355 = sphi 0, %s353
      %s356 = sphi 0, %s355
      %s370 = sphi 0, %s356
    $region4: #{tpu_custom_call.1} parent=1 // loop_header_branch
      %25 = sbr.rel (%p23) target = $region8
    $region5: #{tpu_custom_call.1} parent=1 // loop_body
      %s27 = ssub.s32 %s22, 1
      %s28 = ssub.s32 %s22, 2
      %s29 = sadd.s32 %s22, 1
      %s31 = sadd.s32 %s30, 1
      %p34 = scmp.eq.s32.totalorder %s22, 1
      %p35 = scmp.ne.s32.totalorder %s30, %s32
      %p36 = scmp.eq.s32.totalorder %s22, 0
      %p37 = por %p35, %p36
      %p38 = scmp.ne.s32.totalorder %s30, %s32
      %p39 = scmp.eq.s32.totalorder %s27, 1
      %p40 = por %p38, %p39
      %p41 = scmp.ne.s32.totalorder %s32, %s33
      %p42 = scmp.eq.s32.totalorder %s27, 0
      %p43 = por %p41, %p42
      %p44 = scmp.ne.s32.totalorder %s32, %s33
      %p45 = scmp.eq.s32.totalorder %s28, 1
      %p46 = por %p44, %p45
      %p48 = scmp.ne.s32.totalorder %s33, %s47
      %p49 = scmp.eq.s32.totalorder %s28, 0
      %p50 = por %p48, %p49
      %s52 = sadd.s32 %s51, 1
      %p55 = scmp.eq.s32.totalorder %s22, 1
      %p56 = scmp.ne.s32.totalorder %s51, %s53
      %p57 = scmp.eq.s32.totalorder %s22, 0
      %p58 = por %p56, %p57
      %p59 = scmp.ne.s32.totalorder %s51, %s53
      %p60 = scmp.eq.s32.totalorder %s27, 1
      %p61 = por %p59, %p60
      %p62 = scmp.ne.s32.totalorder %s53, %s54
      %p63 = scmp.eq.s32.totalorder %s27, 0
      %p64 = por %p62, %p63
      %p65 = scmp.ne.s32.totalorder %s53, %s54
      %p66 = scmp.eq.s32.totalorder %s28, 1
      %p67 = por %p65, %p66
      %p69 = scmp.ne.s32.totalorder %s54, %s68
      %p70 = scmp.eq.s32.totalorder %s28, 0
      %p71 = por %p69, %p70
      %s73 = sadd.s32 %s72, 1
      %p76 = scmp.eq.s32.totalorder %s22, 1
      %p77 = scmp.ne.s32.totalorder %s72, %s74
      %p78 = scmp.eq.s32.totalorder %s22, 0
      %p79 = por %p77, %p78
      %p80 = scmp.ne.s32.totalorder %s72, %s74
      %p81 = scmp.eq.s32.totalorder %s27, 1
      %p82 = por %p80, %p81
      %p83 = scmp.ne.s32.totalorder %s74, %s75
      %p84 = scmp.eq.s32.totalorder %s27, 0
      %p85 = por %p83, %p84
      %p86 = scmp.ne.s32.totalorder %s74, %s75
      %p87 = scmp.eq.s32.totalorder %s28, 1
      %p88 = por %p86, %p87
      %p90 = scmp.ne.s32.totalorder %s75, %s89
      %p91 = scmp.eq.s32.totalorder %s28, 0
      %p92 = por %p90, %p91
      %s93 = ssub.s32 %s22, %s29
      %p94 = scmp.eq.s32.totalorder %s93, 0
      %s96 = sadd.s32 %s95, 1
      %s97 = scalar_select %p94, %s95, %s96
      %p100 = pneg %p94
      %p101 = scmp.eq.s32.totalorder %s22, 1
      %p102 = por %p100, %p101
      %p103 = scmp.ne.s32.totalorder %s95, %s98
      %p104 = scmp.eq.s32.totalorder %s22, 0
      %p105 = por %p103, %p104
      %p106 = scmp.ne.s32.totalorder %s95, %s98
      %p107 = scmp.eq.s32.totalorder %s27, 1
      %p108 = por %p106, %p107
      %p109 = scmp.ne.s32.totalorder %s98, %s99
      %p110 = scmp.eq.s32.totalorder %s27, 0
      %p111 = por %p109, %p110
      %p112 = scmp.ne.s32.totalorder %s98, %s99
      %p113 = scmp.eq.s32.totalorder %s28, 1
      %p114 = por %p112, %p113
      %p116 = scmp.ne.s32.totalorder %s99, %s115
      %p117 = scmp.eq.s32.totalorder %s28, 0
      %p118 = por %p116, %p117
      %s119 = ssub.s32 %s22, %s29
      %p120 = scmp.eq.s32.totalorder %s119, 0
      %s122 = sadd.s32 %s121, 1
      %s123 = scalar_select %p120, %s121, %s122
      %p126 = pneg %p120
      %p127 = scmp.eq.s32.totalorder %s22, 1
      %p128 = por %p126, %p127
      %p129 = scmp.ne.s32.totalorder %s121, %s124
      %p130 = scmp.eq.s32.totalorder %s22, 0
      %p131 = por %p129, %p130
      %p132 = scmp.ne.s32.totalorder %s121, %s124
      %p133 = scmp.eq.s32.totalorder %s27, 1
      %p134 = por %p132, %p133
      %p135 = scmp.ne.s32.totalorder %s124, %s125
      %p136 = scmp.eq.s32.totalorder %s27, 0
      %p137 = por %p135, %p136
      %p138 = scmp.ne.s32.totalorder %s124, %s125
      %p139 = scmp.eq.s32.totalorder %s28, 1
      %p140 = por %p138, %p139
      %p142 = scmp.ne.s32.totalorder %s125, %s141
      %p143 = scmp.eq.s32.totalorder %s28, 0
      %p144 = por %p142, %p143
      %s145 = ssub.s32 %s22, %s29
      %p146 = scmp.eq.s32.totalorder %s145, 0
      %s148 = sadd.s32 %s147, 1
      %s149 = scalar_select %p146, %s147, %s148
      %p152 = pneg %p146
      %p153 = scmp.eq.s32.totalorder %s22, 1
      %p154 = por %p152, %p153
      %p155 = scmp.ne.s32.totalorder %s147, %s150
      %p156 = scmp.eq.s32.totalorder %s22, 0
      %p157 = por %p155, %p156
      %p158 = scmp.ne.s32.totalorder %s147, %s150
      %p159 = scmp.eq.s32.totalorder %s27, 1
      %p160 = por %p158, %p159
      %p161 = scmp.ne.s32.totalorder %s150, %s151
      %p162 = scmp.eq.s32.totalorder %s27, 0
      %p163 = por %p161, %p162
      %p164 = scmp.ne.s32.totalorder %s150, %s151
      %p165 = scmp.eq.s32.totalorder %s28, 1
      %p166 = por %p164, %p165
      %p168 = scmp.ne.s32.totalorder %s151, %s167
      %p169 = scmp.eq.s32.totalorder %s28, 0
      %p170 = por %p168, %p169
      %s171 = ssub.s32 %s22, %s29
      %p172 = scmp.eq.s32.totalorder %s171, 0
      %s174 = sadd.s32 %s173, 1
      %s175 = scalar_select %p172, %s173, %s174
      %p178 = pneg %p172
      %p179 = scmp.eq.s32.totalorder %s22, 1
      %p180 = por %p178, %p179
      %p181 = scmp.ne.s32.totalorder %s173, %s176
      %p182 = scmp.eq.s32.totalorder %s22, 0
      %p183 = por %p181, %p182
      %p184 = scmp.ne.s32.totalorder %s173, %s176
      %p185 = scmp.eq.s32.totalorder %s27, 1
      %p186 = por %p184, %p185
      %p187 = scmp.ne.s32.totalorder %s176, %s177
      %p188 = scmp.eq.s32.totalorder %s27, 0
      %p189 = por %p187, %p188
      %p190 = scmp.ne.s32.totalorder %s176, %s177
      %p191 = scmp.eq.s32.totalorder %s28, 1
      %p192 = por %p190, %p191
      %p194 = scmp.ne.s32.totalorder %s177, %s193
      %p195 = scmp.eq.s32.totalorder %s28, 0
      %p196 = por %p194, %p195
      %s197 = ssub.s32 %s22, %s29
      %p198 = scmp.eq.s32.totalorder %s197, 0
      %s200 = sadd.s32 %s199, 1
      %s201 = scalar_select %p198, %s199, %s200
      %p204 = pneg %p198
      %p205 = scmp.eq.s32.totalorder %s22, 1
      %p206 = por %p204, %p205
      %p207 = scmp.ne.s32.totalorder %s199, %s202
      %p208 = scmp.eq.s32.totalorder %s22, 0
      %p209 = por %p207, %p208
      %p210 = scmp.ne.s32.totalorder %s199, %s202
      %p211 = scmp.eq.s32.totalorder %s27, 1
      %p212 = por %p210, %p211
      %p213 = scmp.ne.s32.totalorder %s202, %s203
      %p214 = scmp.eq.s32.totalorder %s27, 0
      %p215 = por %p213, %p214
      %p216 = scmp.ne.s32.totalorder %s202, %s203
      %p217 = scmp.eq.s32.totalorder %s28, 1
      %p218 = por %p216, %p217
      %p220 = scmp.ne.s32.totalorder %s203, %s219
      %p221 = scmp.eq.s32.totalorder %s28, 0
      %p222 = por %p220, %p221
      %s223 = ssub.s32 %s22, %s29
      %p224 = scmp.eq.s32.totalorder %s223, 0
      %s226 = sadd.s32 %s225, 1
      %s227 = scalar_select %p224, %s225, %s226
      %p230 = pneg %p224
      %p231 = scmp.eq.s32.totalorder %s22, 1
      %p232 = por %p230, %p231
      %p233 = scmp.ne.s32.totalorder %s225, %s228
      %p234 = scmp.eq.s32.totalorder %s22, 0
      %p235 = por %p233, %p234
      %p236 = scmp.ne.s32.totalorder %s225, %s228
      %p237 = scmp.eq.s32.totalorder %s27, 1
      %p238 = por %p236, %p237
      %p239 = scmp.ne.s32.totalorder %s228, %s229
      %p240 = scmp.eq.s32.totalorder %s27, 0
      %p241 = por %p239, %p240
      %p242 = scmp.ne.s32.totalorder %s228, %s229
      %p243 = scmp.eq.s32.totalorder %s28, 1
      %p244 = por %p242, %p243
      %p246 = scmp.ne.s32.totalorder %s229, %s245
      %p247 = scmp.eq.s32.totalorder %s28, 0
      %p248 = por %p246, %p247
      %s249 = ssub.s32 %s22, %s29
      %p250 = scmp.eq.s32.totalorder %s249, 0
      %s252 = sadd.s32 %s251, 1
      %s253 = scalar_select %p250, %s251, %s252
      %p256 = pneg %p250
      %p257 = scmp.eq.s32.totalorder %s22, 1
      %p258 = por %p256, %p257
      %p259 = scmp.ne.s32.totalorder %s251, %s254
      %p260 = scmp.eq.s32.totalorder %s22, 0
      %p261 = por %p259, %p260
      %p262 = scmp.ne.s32.totalorder %s251, %s254
      %p263 = scmp.eq.s32.totalorder %s27, 1
      %p264 = por %p262, %p263
      %p265 = scmp.ne.s32.totalorder %s254, %s255
      %p266 = scmp.eq.s32.totalorder %s27, 0
      %p267 = por %p265, %p266
      %p268 = scmp.ne.s32.totalorder %s254, %s255
      %p269 = scmp.eq.s32.totalorder %s28, 1
      %p270 = por %p268, %p269
      %p272 = scmp.ne.s32.totalorder %s255, %s271
      %p273 = scmp.eq.s32.totalorder %s28, 0
      %p274 = por %p272, %p273
      %s275 = ssub.s32 %s22, %s29
      %p276 = scmp.eq.s32.totalorder %s275, 0
      %s278 = sadd.s32 %s277, 1
      %s279 = scalar_select %p276, %s277, %s278
      %p282 = pneg %p276
      %p283 = scmp.eq.s32.totalorder %s22, 1
      %p284 = por %p282, %p283
      %p285 = scmp.ne.s32.totalorder %s277, %s280
      %p286 = scmp.eq.s32.totalorder %s22, 0
      %p287 = por %p285, %p286
      %p288 = scmp.ne.s32.totalorder %s277, %s280
      %p289 = scmp.eq.s32.totalorder %s27, 1
      %p290 = por %p288, %p289
      %p291 = scmp.ne.s32.totalorder %s280, %s281
      %p292 = scmp.eq.s32.totalorder %s27, 0
      %p293 = por %p291, %p292
      %p294 = scmp.ne.s32.totalorder %s280, %s281
      %p295 = scmp.eq.s32.totalorder %s28, 1
      %p296 = por %p294, %p295
      %p298 = scmp.ne.s32.totalorder %s281, %s297
      %p299 = scmp.eq.s32.totalorder %s28, 0
      %p300 = por %p298, %p299
      %s301 = ssub.s32 %s22, %s29
      %p302 = scmp.eq.s32.totalorder %s301, 0
      %s304 = sadd.s32 %s303, 1
      %s305 = scalar_select %p302, %s303, %s304
      %p308 = pneg %p302
      %p309 = scmp.eq.s32.totalorder %s22, 1
      %p310 = por %p308, %p309
      %p311 = scmp.ne.s32.totalorder %s303, %s306
      %p312 = scmp.eq.s32.totalorder %s22, 0
      %p313 = por %p311, %p312
      %p314 = scmp.ne.s32.totalorder %s303, %s306
      %p315 = scmp.eq.s32.totalorder %s27, 1
      %p316 = por %p314, %p315
      %p317 = scmp.ne.s32.totalorder %s306, %s307
      %p318 = scmp.eq.s32.totalorder %s27, 0
      %p319 = por %p317, %p318
      %p320 = scmp.ne.s32.totalorder %s306, %s307
      %p321 = scmp.eq.s32.totalorder %s28, 1
      %p322 = por %p320, %p321
      %p324 = scmp.ne.s32.totalorder %s307, %s323
      %p325 = scmp.eq.s32.totalorder %s28, 0
      %p326 = por %p324, %p325
      %s327 = ssub.s32 %s22, %s29
      %p328 = scmp.eq.s32.totalorder %s327, 0
      %s330 = sadd.s32 %s329, 1
      %s331 = scalar_select %p328, %s329, %s330
      %p334 = pneg %p328
      %p335 = scmp.eq.s32.totalorder %s22, 1
      %p336 = por %p334, %p335
      %p337 = scmp.ne.s32.totalorder %s329, %s332
      %p338 = scmp.eq.s32.totalorder %s22, 0
      %p339 = por %p337, %p338
      %p340 = scmp.ne.s32.totalorder %s329, %s332
      %p341 = scmp.eq.s32.totalorder %s27, 1
      %p342 = por %p340, %p341
      %p343 = scmp.ne.s32.totalorder %s332, %s333
      %p344 = scmp.eq.s32.totalorder %s27, 0
      %p345 = por %p343, %p344
      %p346 = scmp.ne.s32.totalorder %s332, %s333
      %p347 = scmp.eq.s32.totalorder %s28, 1
      %p348 = por %p346, %p347
      %p350 = scmp.ne.s32.totalorder %s333, %s349
      %p351 = scmp.eq.s32.totalorder %s28, 0
      %p352 = por %p350, %p351
      %s354 = sadd.s32 %s353, 1
      %p357 = scmp.eq.s32.totalorder %s22, 1
      %p358 = scmp.ne.s32.totalorder %s353, %s355
      %p359 = scmp.eq.s32.totalorder %s22, 0
      %p360 = por %p358, %p359
      %p361 = scmp.ne.s32.totalorder %s353, %s355
      %p362 = scmp.eq.s32.totalorder %s27, 1
      %p363 = por %p361, %p362
      %p364 = scmp.ne.s32.totalorder %s355, %s356
      %p365 = scmp.eq.s32.totalorder %s27, 0
      %p366 = por %p364, %p365
      %p367 = scmp.ne.s32.totalorder %s355, %s356
      %p368 = scmp.eq.s32.totalorder %s28, 1
      %p369 = por %p367, %p368
      %p371 = scmp.ne.s32.totalorder %s356, %s370
      %p372 = scmp.eq.s32.totalorder %s28, 0
      %p373 = por %p371, %p372
      %p374 = scmp.le.s32.totalorder 1, %s22
      %p375 = scmp.lt.s32.totalorder %s22, 3
      %p376 = pnand %p374, %p375
      %p377 = pneg %p376
      // Predicated region
      $region9: #{tpu_custom_call.1} parent=5 // pred_check
        _
      $region10: #{tpu_custom_call.1} parent=5 // pred_check_branch
        %379 = sbr.rel (%p376) target = $region12
      $region11: #{tpu_custom_call.1} parent=5 // pred_region
        %s380 = ssub.s32 %s22, 1
        // Predicated region
        $region13: #{tpu_custom_call.1} parent=11 // pred_check
          %p381 = pneg %p43
        $region14: #{tpu_custom_call.1} parent=11 // pred_check_branch
          %383 = sbr.rel (%p381) target = $region16
        $region15: #{tpu_custom_call.1} parent=11 // pred_region
          %385 = vsyncadd [#allocation6], 0
          %s386 = sshll.u32 %s0, 4
          %s387 = int_to_ptr.hbm [resolvable:$true] %s386
          %s388 = sshll.u32 [#allocation5], 4
          %s389 = int_to_ptr.vmem [resolvable:$true] %s388
          %394 = dma.hbm_to_vmem [thread:$0]  %s387, 256, %s389, [#allocation6], 128, 128, 8
        $region16: #{tpu_custom_call.1} parent=11 // pred_fallthru
          _
        // Predicated region
        $region17: #{tpu_custom_call.1} parent=11 // pred_check
          %p395 = pneg %p64
        $region18: #{tpu_custom_call.1} parent=11 // pred_check_branch
          %397 = sbr.rel (%p395) target = $region20
        $region19: #{tpu_custom_call.1} parent=11 // pred_region
          _
        $region20: #{tpu_custom_call.1} parent=11 // pred_fallthru
          _
        // Predicated region
        $region21: #{tpu_custom_call.1} parent=11 // pred_check
          %p398 = pneg %p85
        $region22: #{tpu_custom_call.1} parent=11 // pred_check_branch
          %400 = sbr.rel (%p398) target = $region24
        $region23: #{tpu_custom_call.1} parent=11 // pred_region
          %402 = vsyncadd [#allocation9], 0
          %s404 = sshll.u32 %s2, 4
          %s405 = int_to_ptr.hbm [resolvable:$true] %s404
          %s406 = sshll.u32 [#allocation8], 4
          %s407 = int_to_ptr.vmem [resolvable:$true] %s406
          %409 = dma.hbm_to_vmem [thread:$0]  %s405, 16, %s407, [#allocation9]
        $region24: #{tpu_custom_call.1} parent=11 // pred_fallthru
          _
      $region12: #{tpu_custom_call.1} parent=5 // pred_fallthru
        _
      %p410 = scmp.lt.s32.totalorder %s22, 2
      // Predicated region
      $region25: #{tpu_custom_call.1} parent=5 // pred_check
        %p411 = pneg %p410
      $region26: #{tpu_custom_call.1} parent=5 // pred_check_branch
        %413 = sbr.rel (%p411) target = $region28
      $region27: #{tpu_custom_call.1} parent=5 // pred_region
        // Predicated region
        $region29: #{tpu_custom_call.1} parent=27 // pred_check
          %p414 = pneg %p105
        $region30: #{tpu_custom_call.1} parent=27 // pred_check_branch
          %416 = sbr.rel (%p414) target = $region32
        $region31: #{tpu_custom_call.1} parent=27 // pred_region
          %s417 = sand.u32 %s22, 1
          %s418 = scalar_lea.sflag [#allocation6], %s417
          %s419 = sand.u32 %s95, 1
          %s420 = smul.addr %s419, 128
          %s421 = scalar_lea.vmem [#allocation10], %s420
          %423 = vsyncadd %s418, 0
          %s424 = smul.addr %s22, 16
          %s425 = smul.addr %s424, 8
          %s426 = scalar_lea.hbm %s3, %s425
          %s427 = sshll.u32 %s426, 4
          %s428 = int_to_ptr.hbm [resolvable:$true] %s427
          %s429 = sshll.u32 %s421, 4
          %s430 = int_to_ptr.vmem [resolvable:$true] %s429
          %435 = dma.hbm_to_vmem [thread:$0]  %s428, 2048, %s430, %s418, 128, 128, 8
        $region32: #{tpu_custom_call.1} parent=27 // pred_fallthru
          _
        // Predicated region
        $region33: #{tpu_custom_call.1} parent=27 // pred_check
          %p436 = pneg %p131
        $region34: #{tpu_custom_call.1} parent=27 // pred_check_branch
          %438 = sbr.rel (%p436) target = $region36
        $region35: #{tpu_custom_call.1} parent=27 // pred_region
          %p439 = scmp.lt.s32.totalorder %s22, 1
          %s440 = scalar_select %p439, %s22, 1
          %s441 = scalar_lea.vmem %s4, %s440
        $region36: #{tpu_custom_call.1} parent=27 // pred_fallthru
          _
        // Predicated region
        $region37: #{tpu_custom_call.1} parent=27 // pred_check
          %p442 = pneg %p157
        $region38: #{tpu_custom_call.1} parent=27 // pred_check_branch
          %444 = sbr.rel (%p442) target = $region40
        $region39: #{tpu_custom_call.1} parent=27 // pred_region
          %p445 = scmp.lt.s32.totalorder %s22, 1
          %s446 = scalar_select %p445, %s22, 1
          %s447 = smul.addr %s446, 16
          %s448 = smul.addr %s447, 4
          %s449 = scalar_lea.vmem %s5, %s448
        $region40: #{tpu_custom_call.1} parent=27 // pred_fallthru
          _
        // Predicated region
        $region41: #{tpu_custom_call.1} parent=27 // pred_check
          %p450 = pneg %p183
        $region42: #{tpu_custom_call.1} parent=27 // pred_check_branch
          %452 = sbr.rel (%p450) target = $region44
        $region43: #{tpu_custom_call.1} parent=27 // pred_region
          %p453 = scmp.lt.s32.totalorder %s22, 1
          %s454 = scalar_select %p453, %s22, 1
          %s455 = scalar_lea.vmem %s6, %s454
        $region44: #{tpu_custom_call.1} parent=27 // pred_fallthru
          _
        // Predicated region
        $region45: #{tpu_custom_call.1} parent=27 // pred_check
          %p456 = pneg %p209
        $region46: #{tpu_custom_call.1} parent=27 // pred_check_branch
          %458 = sbr.rel (%p456) target = $region48
        $region47: #{tpu_custom_call.1} parent=27 // pred_region
          %p459 = scmp.lt.s32.totalorder %s22, 1
          %s460 = scalar_select %p459, %s22, 1
          %s461 = scalar_lea.vmem %s7, %s460
        $region48: #{tpu_custom_call.1} parent=27 // pred_fallthru
          _
        // Predicated region
        $region49: #{tpu_custom_call.1} parent=27 // pred_check
          %p462 = pneg %p235
        $region50: #{tpu_custom_call.1} parent=27 // pred_check_branch
          %464 = sbr.rel (%p462) target = $region52
        $region51: #{tpu_custom_call.1} parent=27 // pred_region
          %p465 = scmp.lt.s32.totalorder %s22, 1
          %s466 = scalar_select %p465, %s22, 1
          %s467 = scalar_lea.vmem %s8, %s466
        $region52: #{tpu_custom_call.1} parent=27 // pred_fallthru
          _
        // Predicated region
        $region53: #{tpu_custom_call.1} parent=27 // pred_check
          %p468 = pneg %p261
        $region54: #{tpu_custom_call.1} parent=27 // pred_check_branch
          %470 = sbr.rel (%p468) target = $region56
        $region55: #{tpu_custom_call.1} parent=27 // pred_region
          %s471 = sand.u32 %s22, 1
          %s472 = scalar_lea.sflag [#allocation6], %s471
          %s473 = sand.u32 %s251, 1
          %s474 = smul.addr %s473, 64
          %s475 = scalar_lea.vmem [#allocation11], %s474
          %477 = vsyncadd %s472, 0
          %s478 = smul.addr %s22, 16
          %s479 = smul.addr %s478, 4
          %s480 = scalar_lea.hbm %s9, %s479
          %s481 = sshll.u32 %s480, 4
          %s482 = int_to_ptr.hbm [resolvable:$true] %s481
          %s483 = sshll.u32 %s475, 4
          %s484 = int_to_ptr.vmem [resolvable:$true] %s483
          %489 = dma.hbm_to_vmem [thread:$0]  %s482, 1024, %s484, %s472, 64, 64, 4
        $region56: #{tpu_custom_call.1} parent=27 // pred_fallthru
          _
        // Predicated region
        $region57: #{tpu_custom_call.1} parent=27 // pred_check
          %p490 = pneg %p287
        $region58: #{tpu_custom_call.1} parent=27 // pred_check_branch
          %492 = sbr.rel (%p490) target = $region60
        $region59: #{tpu_custom_call.1} parent=27 // pred_region
          %p493 = scmp.lt.s32.totalorder %s22, 1
          %s494 = scalar_select %p493, %s22, 1
          %s495 = scalar_lea.vmem %s10, %s494
        $region60: #{tpu_custom_call.1} parent=27 // pred_fallthru
          _
        // Predicated region
        $region61: #{tpu_custom_call.1} parent=27 // pred_check
          %p496 = pneg %p313
        $region62: #{tpu_custom_call.1} parent=27 // pred_check_branch
          %498 = sbr.rel (%p496) target = $region64
        $region63: #{tpu_custom_call.1} parent=27 // pred_region
          %s499 = sand.u32 %s22, 1
          %s500 = scalar_lea.sflag [#allocation6], %s499
          %s501 = sand.u32 %s303, 1
          %s502 = scalar_lea.vmem [#allocation12], %s501
          %504 = vsyncadd %s500, 0
          %s505 = scalar_lea.hbm %s11, %s22
          %s507 = sshll.u32 %s505, 4
          %s508 = int_to_ptr.hbm [resolvable:$true] %s507
          %s509 = sshll.u32 %s502, 4
          %s510 = int_to_ptr.vmem [resolvable:$true] %s509
          %512 = dma.hbm_to_vmem [thread:$0]  %s508, 16, %s510, %s500
        $region64: #{tpu_custom_call.1} parent=27 // pred_fallthru
          _
        // Predicated region
        $region65: #{tpu_custom_call.1} parent=27 // pred_check
          %p513 = pneg %p339
        $region66: #{tpu_custom_call.1} parent=27 // pred_check_branch
          %515 = sbr.rel (%p513) target = $region68
        $region67: #{tpu_custom_call.1} parent=27 // pred_region
          %p516 = scmp.lt.s32.totalorder %s22, 1
          %s517 = scalar_select %p516, %s22, 1
          %s518 = scalar_lea.vmem %s12, %s517
        $region68: #{tpu_custom_call.1} parent=27 // pred_fallthru
          _
      $region28: #{tpu_custom_call.1} parent=5 // pred_fallthru
        _
      %p519 = scmp.le.s32.totalorder 1, %s22
      %p520 = scmp.lt.s32.totalorder %s22, 3
      %p521 = pnand %p519, %p520
      %p522 = pneg %p521
      // Predicated region
      $region69: #{tpu_custom_call.1} parent=5 // pred_check
        _
      $region70: #{tpu_custom_call.1} parent=5 // pred_check_branch
        %524 = sbr.rel (%p521) target = $region72
      $region71: #{tpu_custom_call.1} parent=5 // pred_region
        %s525 = ssub.s32 %s22, 1
        // Predicated region
        $region73: #{tpu_custom_call.1} parent=71 // pred_check
          %p526 = pneg %p43
        $region74: #{tpu_custom_call.1} parent=71 // pred_check_branch
          %528 = sbr.rel (%p526) target = $region76
        $region75: #{tpu_custom_call.1} parent=71 // pred_region
          %530 = dma.done [#allocation6], 256
        $region76: #{tpu_custom_call.1} parent=71 // pred_fallthru
          _
        // Predicated region
        $region77: #{tpu_custom_call.1} parent=71 // pred_check
          %p531 = pneg %p85
        $region78: #{tpu_custom_call.1} parent=71 // pred_check_branch
          %533 = sbr.rel (%p531) target = $region80
        $region79: #{tpu_custom_call.1} parent=71 // pred_region
          %535 = dma.done [#allocation9], 16
        $region80: #{tpu_custom_call.1} parent=71 // pred_fallthru
          _
        %s536 = sand.u32 %s27, 1
        %s537 = scalar_lea.sflag [#allocation6], %s536
        %s538 = sand.u32 %s98, 1
        %s539 = smul.addr %s538, 128
        %s540 = scalar_lea.vmem [#allocation10], %s539
        // Predicated region
        $region81: #{tpu_custom_call.1} parent=71 // pred_check
          %p541 = pneg %p111
        $region82: #{tpu_custom_call.1} parent=71 // pred_check_branch
          %543 = sbr.rel (%p541) target = $region84
        $region83: #{tpu_custom_call.1} parent=71 // pred_region
          %545 = dma.done %s537, 2048
        $region84: #{tpu_custom_call.1} parent=71 // pred_fallthru
          _
        %s546 = sand.u32 %s27, 1
        %s547 = scalar_lea.sflag [#allocation6], %s546
        %s548 = sand.u32 %s254, 1
        %s549 = smul.addr %s548, 64
        %s550 = scalar_lea.vmem [#allocation11], %s549
        // Predicated region
        $region85: #{tpu_custom_call.1} parent=71 // pred_check
          %p551 = pneg %p267
        $region86: #{tpu_custom_call.1} parent=71 // pred_check_branch
          %553 = sbr.rel (%p551) target = $region88
        $region87: #{tpu_custom_call.1} parent=71 // pred_region
          %555 = dma.done %s547, 1024
        $region88: #{tpu_custom_call.1} parent=71 // pred_fallthru
          _
        %s556 = sand.u32 %s27, 1
        %s557 = scalar_lea.sflag [#allocation6], %s556
        %s558 = sand.u32 %s306, 1
        %s559 = scalar_lea.vmem [#allocation12], %s558
        // Predicated region
        $region89: #{tpu_custom_call.1} parent=71 // pred_check
          %p560 = pneg %p319
        $region90: #{tpu_custom_call.1} parent=71 // pred_check_branch
          %562 = sbr.rel (%p560) target = $region92
        $region91: #{tpu_custom_call.1} parent=71 // pred_region
          %564 = dma.done %s557, 16
        $region92: #{tpu_custom_call.1} parent=71 // pred_fallthru
          _
        %p565 = pneg %p43
        %p566 = pneg %p40
        %p567 = pneg %p64
        %p568 = pneg %p61
        %p569 = pneg %p85
        %p570 = pneg %p82
        %s571 = sand.u32 %s27, 1
        %s572 = scalar_lea.sflag [#allocation6], %s571
        %s573 = sand.u32 %s98, 1
        %s574 = smul.addr %s573, 128
        %s575 = scalar_lea.vmem [#allocation10], %s574
        %p576 = pneg %p111
        %p577 = pneg %p108
        %p578 = scmp.lt.s32.totalorder %s27, 1
        %s579 = scalar_select %p578, %s27, 1
        %s580 = scalar_lea.vmem %s4, %s579
        %p581 = pneg %p137
        %p582 = pneg %p134
        %p583 = scmp.lt.s32.totalorder %s27, 1
        %s584 = scalar_select %p583, %s27, 1
        %s585 = smul.addr %s584, 16
        %s586 = smul.addr %s585, 4
        %s587 = scalar_lea.vmem %s5, %s586
        %p588 = pneg %p163
        %p589 = pneg %p160
        %p590 = scmp.lt.s32.totalorder %s27, 1
        %s591 = scalar_select %p590, %s27, 1
        %s592 = scalar_lea.vmem %s6, %s591
        %p593 = pneg %p189
        %p594 = pneg %p186
        %p595 = scmp.lt.s32.totalorder %s27, 1
        %s596 = scalar_select %p595, %s27, 1
        %s597 = scalar_lea.vmem %s7, %s596
        %p598 = pneg %p215
        %p599 = pneg %p212
        %p600 = scmp.lt.s32.totalorder %s27, 1
        %s601 = scalar_select %p600, %s27, 1
        %s602 = scalar_lea.vmem %s8, %s601
        %p603 = pneg %p241
        %p604 = pneg %p238
        %s605 = sand.u32 %s27, 1
        %s606 = scalar_lea.sflag [#allocation6], %s605
        %s607 = sand.u32 %s254, 1
        %s608 = smul.addr %s607, 64
        %s609 = scalar_lea.vmem [#allocation11], %s608
        %p610 = pneg %p267
        %p611 = pneg %p264
        %p612 = scmp.lt.s32.totalorder %s27, 1
        %s613 = scalar_select %p612, %s27, 1
        %s614 = scalar_lea.vmem %s10, %s613
        %p615 = pneg %p293
        %p616 = pneg %p290
        %s617 = sand.u32 %s27, 1
        %s618 = scalar_lea.sflag [#allocation6], %s617
        %s619 = sand.u32 %s306, 1
        %s620 = scalar_lea.vmem [#allocation12], %s619
        %p621 = pneg %p319
        %p622 = pneg %p316
        %p623 = scmp.lt.s32.totalorder %s27, 1
        %s624 = scalar_select %p623, %s27, 1
        %s625 = scalar_lea.vmem %s12, %s624
        %p626 = pneg %p345
        %p627 = pneg %p342
        %p628 = pneg %p366
        %p629 = pneg %p363
        %p630 = scmp.lt.s32.totalorder %s27, 1
        %s631 = scalar_select %p630, %s27, 1
        %s632 = scalar_lea.vmem %s4, %s631
        %p633 = scmp.lt.s32.totalorder %s27, 1
        %s634 = scalar_select %p633, %s27, 1
        %s635 = smul.addr %s634, 16
        %s636 = smul.addr %s635, 4
        %s637 = scalar_lea.vmem %s5, %s636
        %p638 = scmp.lt.s32.totalorder %s27, 1
        %s639 = scalar_select %p638, %s27, 1
        %s640 = scalar_lea.vmem %s6, %s639
        %p641 = scmp.lt.s32.totalorder %s27, 1
        %s642 = scalar_select %p641, %s27, 1
        %s643 = scalar_lea.vmem %s7, %s642
        %p644 = scmp.lt.s32.totalorder %s27, 1
        %s645 = scalar_select %p644, %s27, 1
        %s646 = scalar_lea.vmem %s8, %s645
        %p647 = scmp.lt.s32.totalorder %s27, 1
        %s648 = scalar_select %p647, %s27, 1
        %s649 = scalar_lea.vmem %s10, %s648
        %p650 = scmp.lt.s32.totalorder %s27, 1
        %s651 = scalar_select %p650, %s27, 1
        %s652 = scalar_lea.vmem %s12, %s651
        %p654 = scmp.eq.s32.totalorder %s27, 0
        // Predicated region
        $region93: #{tpu_custom_call.1} parent=71 // pred_check
          %p655 = pneg %p654
        $region94: #{tpu_custom_call.1} parent=71 // pred_check_branch
          %657 = sbr.rel (%p655) target = $region96
        $region95: #{tpu_custom_call.1} parent=71 // pred_region
          %v658 = vld [vmem:[#allocation5] sm:$0xff]
          %v659 = vld [vmem:[#allocation5 + $0x8] sm:$0xff]
          %660 = vst [vmem:[#allocation2] sm:$0xff] %v658
          %661 = vst [vmem:[#allocation2 + $0x8] sm:$0xff] %v659
          %v662 = vlaneseq
          %v663 = vand.u32 %v662, 127
          %v664 = vld [vmem:[%s1] sm:$0xff]
          %v665 = vld [vmem:[%s1 + $0x8] sm:$0xff]
          %v666 = vld [vmem:[%s1 + $0x10] sm:$0xff]
          %v667 = vld [vmem:[%s1 + $0x18] sm:$0xff]
          %v668 = vld [vmem:[%s1 + $0x20] sm:$0xff]
          %v669 = vld [vmem:[%s1 + $0x28] sm:$0xff]
          %v670 = vld [vmem:[%s1 + $0x30] sm:$0xff]
          %v671 = vld [vmem:[%s1 + $0x38] sm:$0xff]
          %v672 = vld [vmem:[%s1 + $0x40] sm:$0xff]
          %v673 = vld [vmem:[%s1 + $0x48] sm:$0xff]
          %v674 = vld [vmem:[%s1 + $0x50] sm:$0xff]
          %v675 = vld [vmem:[%s1 + $0x58] sm:$0xff]
          %v676 = vld [vmem:[%s1 + $0x60] sm:$0xff]
          %v677 = vld [vmem:[%s1 + $0x68] sm:$0xff]
          %v678 = vld [vmem:[%s1 + $0x70] sm:$0xff]
          %v679 = vld [vmem:[%s1 + $0x78] sm:$0xff]
          %680 = vset.pattern.permute.xlu0 0
          %681 = vperm.xlu0 %680, %v664
          %v682 = vpop.permute.xlu0 %681
          %683 = vset.pattern.permute.xlu0 0
          %684 = vperm.xlu0 %683, %v665
          %v685 = vpop.permute.xlu0 %684
          %686 = vset.pattern.permute.xlu0 0
          %687 = vperm.xlu0 %686, %v666
          %v688 = vpop.permute.xlu0 %687
          %689 = vset.pattern.permute.xlu0 0
          %690 = vperm.xlu0 %689, %v667
          %v691 = vpop.permute.xlu0 %690
          %692 = vset.pattern.permute.xlu0 0
          %693 = vperm.xlu0 %692, %v668
          %v694 = vpop.permute.xlu0 %693
          %695 = vset.pattern.permute.xlu0 0
          %696 = vperm.xlu0 %695, %v669
          %v697 = vpop.permute.xlu0 %696
          %698 = vset.pattern.permute.xlu0 0
          %699 = vperm.xlu0 %698, %v670
          %v700 = vpop.permute.xlu0 %699
          %701 = vset.pattern.permute.xlu0 0
          %702 = vperm.xlu0 %701, %v671
          %v703 = vpop.permute.xlu0 %702
          %704 = vset.pattern.permute.xlu0 0
          %705 = vperm.xlu0 %704, %v672
          %v706 = vpop.permute.xlu0 %705
          %707 = vset.pattern.permute.xlu0 0
          %708 = vperm.xlu0 %707, %v673
          %v709 = vpop.permute.xlu0 %708
          %710 = vset.pattern.permute.xlu0 0
          %711 = vperm.xlu0 %710, %v674
          %v712 = vpop.permute.xlu0 %711
          %713 = vset.pattern.permute.xlu0 0
          %714 = vperm.xlu0 %713, %v675
          %v715 = vpop.permute.xlu0 %714
          %716 = vset.pattern.permute.xlu0 0
          %717 = vperm.xlu0 %716, %v676
          %v718 = vpop.permute.xlu0 %717
          %719 = vset.pattern.permute.xlu0 0
          %720 = vperm.xlu0 %719, %v677
          %v721 = vpop.permute.xlu0 %720
          %722 = vset.pattern.permute.xlu0 0
          %723 = vperm.xlu0 %722, %v678
          %v724 = vpop.permute.xlu0 %723
          %725 = vset.pattern.permute.xlu0 0
          %726 = vperm.xlu0 %725, %v679
          %v727 = vpop.permute.xlu0 %726
          %vm728 = vcmp.eq.s32.totalorder %v663, %v682
          %vm729 = vcmp.eq.s32.totalorder %v663, %v685
          %vm730 = vcmp.eq.s32.totalorder %v663, %v688
          %vm731 = vcmp.eq.s32.totalorder %v663, %v691
          %vm732 = vcmp.eq.s32.totalorder %v663, %v694
          %vm733 = vcmp.eq.s32.totalorder %v663, %v697
          %vm734 = vcmp.eq.s32.totalorder %v663, %v700
          %vm735 = vcmp.eq.s32.totalorder %v663, %v703
          %vm736 = vcmp.eq.s32.totalorder %v663, %v706
          %vm737 = vcmp.eq.s32.totalorder %v663, %v709
          %vm738 = vcmp.eq.s32.totalorder %v663, %v712
          %vm739 = vcmp.eq.s32.totalorder %v663, %v715
          %vm740 = vcmp.eq.s32.totalorder %v663, %v718
          %vm741 = vcmp.eq.s32.totalorder %v663, %v721
          %vm742 = vcmp.eq.s32.totalorder %v663, %v724
          %vm743 = vcmp.eq.s32.totalorder %v663, %v727
          %v744 = vsel %vm728, 1, 0
          %v745 = vsel %vm729, 1, 0
          %v746 = vsel %vm730, 1, 0
          %v747 = vsel %vm731, 1, 0
          %v748 = vsel %vm732, 1, 0
          %v749 = vsel %vm733, 1, 0
          %v750 = vsel %vm734, 1, 0
          %v751 = vsel %vm735, 1, 0
          %v752 = vsel %vm736, 1, 0
          %v753 = vsel %vm737, 1, 0
          %v754 = vsel %vm738, 1, 0
          %v755 = vsel %vm739, 1, 0
          %v756 = vsel %vm740, 1, 0
          %v757 = vsel %vm741, 1, 0
          %v758 = vsel %vm742, 1, 0
          %v759 = vsel %vm743, 1, 0
          %v760 = vcvt.s32.f32 %v744
          %v761 = vcvt.s32.f32 %v745
          %v762 = vcvt.s32.f32 %v746
          %v763 = vcvt.s32.f32 %v747
          %v764 = vcvt.s32.f32 %v748
          %v765 = vcvt.s32.f32 %v749
          %v766 = vcvt.s32.f32 %v750
          %v767 = vcvt.s32.f32 %v751
          %v768 = vcvt.s32.f32 %v752
          %v769 = vcvt.s32.f32 %v753
          %v770 = vcvt.s32.f32 %v754
          %v771 = vcvt.s32.f32 %v755
          %v772 = vcvt.s32.f32 %v756
          %v773 = vcvt.s32.f32 %v757
          %v774 = vcvt.s32.f32 %v758
          %v775 = vcvt.s32.f32 %v759
          %v776 = vpack.c.bf16 %v760, %v760
          %v777 = vpack.c.bf16 %v761, %v761
          %v778 = vpack.c.bf16 %v762, %v762
          %v779 = vpack.c.bf16 %v763, %v763
          %v780 = vpack.c.bf16 %v764, %v764
          %v781 = vpack.c.bf16 %v765, %v765
          %v782 = vpack.c.bf16 %v766, %v766
          %v783 = vpack.c.bf16 %v767, %v767
          %v784 = vpack.c.bf16 %v768, %v768
          %v785 = vpack.c.bf16 %v769, %v769
          %v786 = vpack.c.bf16 %v770, %v770
          %v787 = vpack.c.bf16 %v771, %v771
          %v788 = vpack.c.bf16 %v772, %v772
          %v789 = vpack.c.bf16 %v773, %v773
          %v790 = vpack.c.bf16 %v774, %v774
          %v791 = vpack.c.bf16 %v775, %v775
          %vm792 = vcmask 125952
          %793 = vst.msk [vmem:[#allocation3] sm:$0xf] %vm792, %v776
          %794 = vst.msk [vmem:[#allocation3 + $0x4] sm:$0xf] %vm792, %v777
          %795 = vst.msk [vmem:[#allocation3 + $0x8] sm:$0xf] %vm792, %v778
          %796 = vst.msk [vmem:[#allocation3 + $0xc] sm:$0xf] %vm792, %v779
          %797 = vst.msk [vmem:[#allocation3 + $0x10] sm:$0xf] %vm792, %v780
          %798 = vst.msk [vmem:[#allocation3 + $0x14] sm:$0xf] %vm792, %v781
          %799 = vst.msk [vmem:[#allocation3 + $0x18] sm:$0xf] %vm792, %v782
          %800 = vst.msk [vmem:[#allocation3 + $0x1c] sm:$0xf] %vm792, %v783
          %801 = vst.msk [vmem:[#allocation3 + $0x20] sm:$0xf] %vm792, %v784
          %802 = vst.msk [vmem:[#allocation3 + $0x24] sm:$0xf] %vm792, %v785
          %803 = vst.msk [vmem:[#allocation3 + $0x28] sm:$0xf] %vm792, %v786
          %804 = vst.msk [vmem:[#allocation3 + $0x2c] sm:$0xf] %vm792, %v787
          %805 = vst.msk [vmem:[#allocation3 + $0x30] sm:$0xf] %vm792, %v788
          %806 = vst.msk [vmem:[#allocation3 + $0x34] sm:$0xf] %vm792, %v789
          %807 = vst.msk [vmem:[#allocation3 + $0x38] sm:$0xf] %vm792, %v790
          %808 = vst.msk [vmem:[#allocation3 + $0x3c] sm:$0xf] %vm792, %v791
          %v809 = vlaneseq
          %v810 = vshrl.u32 %v809, 7
          %v811 = vadd.s32 %v810, 8
          %v812 = vld [vmem:[#allocation8] sm:$0x1]
          %v813 = vperm.slane %v812, 0
          %vm814 = vcmp.eq.s32.totalorder %v810, %v813
          %vm815 = vcmp.eq.s32.totalorder %v811, %v813
          %v816 = vsel %vm814, 1, 0
          %v817 = vsel %vm815, 1, 0
          %v818 = vcvt.s32.f32 %v816
          %v819 = vcvt.s32.f32 %v817
          %v820 = vpack.c.bf16 %v818, %v818
          %v821 = vpack.c.bf16 %v819, %v819
          %822 = vst [vmem:[#allocation4] sm:$0xf] %v820
          %823 = vst [vmem:[#allocation4 + $0x4] sm:$0xf] %v821
        $region96: #{tpu_custom_call.1} parent=71 // pred_fallthru
          _
        %v824 = vld [vmem:[#allocation2] sm:$0xff]
        %v825 = vld [vmem:[#allocation2 + $0x8] sm:$0xff]
        %v826 = vld [vmem:[#allocation3] sm:$0xf]
        %v827 = vld [vmem:[#allocation3 + $0x4] sm:$0xf]
        %v828 = vld [vmem:[#allocation3 + $0x8] sm:$0xf]
        %v829 = vld [vmem:[#allocation3 + $0xc] sm:$0xf]
        %v830 = vld [vmem:[#allocation3 + $0x10] sm:$0xf]
        %v831 = vld [vmem:[#allocation3 + $0x14] sm:$0xf]
        %v832 = vld [vmem:[#allocation3 + $0x18] sm:$0xf]
        %v833 = vld [vmem:[#allocation3 + $0x1c] sm:$0xf]
        %v834 = vld [vmem:[#allocation3 + $0x20] sm:$0xf]
        %v835 = vld [vmem:[#allocation3 + $0x24] sm:$0xf]
        %v836 = vld [vmem:[#allocation3 + $0x28] sm:$0xf]
        %v837 = vld [vmem:[#allocation3 + $0x2c] sm:$0xf]
        %v838 = vld [vmem:[#allocation3 + $0x30] sm:$0xf]
        %v839 = vld [vmem:[#allocation3 + $0x34] sm:$0xf]
        %v840 = vld [vmem:[#allocation3 + $0x38] sm:$0xf]
        %v841 = vld [vmem:[#allocation3 + $0x3c] sm:$0xf]
        %v842 = vpack.c.bf16 %v825, %v824
        %v843 = vld [vmem:[%s540] sm:$0xff]
        %v844 = vld [vmem:[%s540 + $0x8] sm:$0xff]
        %v845 = vld [vmem:[%s540 + $0x10] sm:$0xff]
        %v846 = vld [vmem:[%s540 + $0x18] sm:$0xff]
        %v847 = vld [vmem:[%s540 + $0x20] sm:$0xff]
        %v848 = vld [vmem:[%s540 + $0x28] sm:$0xff]
        %v849 = vld [vmem:[%s540 + $0x30] sm:$0xff]
        %v850 = vld [vmem:[%s540 + $0x38] sm:$0xff]
        %v851 = vld [vmem:[%s540 + $0x40] sm:$0xff]
        %v852 = vld [vmem:[%s540 + $0x48] sm:$0xff]
        %v853 = vld [vmem:[%s540 + $0x50] sm:$0xff]
        %v854 = vld [vmem:[%s540 + $0x58] sm:$0xff]
        %v855 = vld [vmem:[%s540 + $0x60] sm:$0xff]
        %v856 = vld [vmem:[%s540 + $0x68] sm:$0xff]
        %v857 = vld [vmem:[%s540 + $0x70] sm:$0xff]
        %v858 = vld [vmem:[%s540 + $0x78] sm:$0xff]
        %v875 = vunpack.c.l.b16 %v826
        %v876 = vunpack.c.l.b16 %v827
        %v877 = vunpack.c.l.b16 %v828
        %v878 = vunpack.c.l.b16 %v829
        %v879 = vunpack.c.l.b16 %v830
        %v880 = vunpack.c.l.b16 %v831
        %v881 = vunpack.c.l.b16 %v832
        %v882 = vunpack.c.l.b16 %v833
        %v883 = vunpack.c.l.b16 %v834
        %v884 = vunpack.c.l.b16 %v835
        %v885 = vunpack.c.l.b16 %v836
        %v886 = vunpack.c.l.b16 %v837
        %v887 = vunpack.c.l.b16 %v838
        %v888 = vunpack.c.l.b16 %v839
        %v889 = vunpack.c.l.b16 %v840
        %v890 = vunpack.c.l.b16 %v841
        %v891 = vpack.c.b16 %v876, %v875
        %v892 = vpack.c.b16 %v878, %v877
        %v893 = vpack.c.b16 %v880, %v879
        %v894 = vpack.c.b16 %v882, %v881
        %v895 = vpack.c.b16 %v884, %v883
        %v896 = vpack.c.b16 %v886, %v885
        %v897 = vpack.c.b16 %v888, %v887
        %v898 = vpack.c.b16 %v890, %v889
        %vm899 = vcmask 130048
        %v901 = vsel %vm899, %v891, 0
        %v904 = vsel %vm899, %v892, 0
        %v907 = vsel %vm899, %v893, 0
        %v910 = vsel %vm899, %v894, 0
        %v913 = vsel %vm899, %v895, 0
        %v916 = vsel %vm899, %v896, 0
        %v919 = vsel %vm899, %v897, 0
        %v922 = vsel %vm899, %v898, 0
        %924 = vmatpush.bf16.msra.mxu0 0
        %925 = vmatpush.bf16.msra.mxu0 0
        %926 = vmatpush.bf16.msra.mxu0 0
        %927 = vmatpush.bf16.msra.mxu0 0
        %928 = vmatpush.bf16.msra.mxu0 0
        %929 = vmatpush.bf16.msra.mxu0 0
        %930 = vmatpush.bf16.msra.mxu0 0
        %931 = vmatpush.bf16.msra.mxu0 %v842
        %932 = vmatmul.bf16.gmra.mxu0 %v901
        %v933 = vpop.f32.mrf.mxu0
        %v934 = vadd.f32 %v843, %v933
        %v935 = vpop.f32.mrf.mxu0
        %v936 = vadd.f32 %v844, %v935
        %937 = vmatmul.bf16.gmra.mxu0 %v904
        %v938 = vpop.f32.mrf.mxu0
        %v939 = vadd.f32 %v845, %v938
        %v940 = vpop.f32.mrf.mxu0
        %v941 = vadd.f32 %v846, %v940
        %942 = vmatmul.bf16.gmra.mxu0 %v907
        %v943 = vpop.f32.mrf.mxu0
        %v944 = vadd.f32 %v847, %v943
        %v945 = vpop.f32.mrf.mxu0
        %v946 = vadd.f32 %v848, %v945
        %947 = vmatmul.bf16.gmra.mxu0 %v910
        %v948 = vpop.f32.mrf.mxu0
        %v949 = vadd.f32 %v849, %v948
        %v950 = vpop.f32.mrf.mxu0
        %v951 = vadd.f32 %v850, %v950
        %952 = vmatmul.bf16.gmra.mxu0 %v913
        %v953 = vpop.f32.mrf.mxu0
        %v954 = vadd.f32 %v851, %v953
        %v955 = vpop.f32.mrf.mxu0
        %v956 = vadd.f32 %v852, %v955
        %957 = vmatmul.bf16.gmra.mxu0 %v916
        %v958 = vpop.f32.mrf.mxu0
        %v959 = vadd.f32 %v853, %v958
        %v960 = vpop.f32.mrf.mxu0
        %v961 = vadd.f32 %v854, %v960
        %962 = vmatmul.bf16.gmra.mxu0 %v919
        %v963 = vpop.f32.mrf.mxu0
        %v964 = vadd.f32 %v855, %v963
        %v965 = vpop.f32.mrf.mxu0
        %v966 = vadd.f32 %v856, %v965
        %967 = vmatmul.bf16.gmra.mxu0 %v922
        %v968 = vpop.f32.mrf.mxu0
        %v969 = vadd.f32 %v857, %v968
        %v970 = vpop.f32.mrf.mxu0
        %v971 = vadd.f32 %v858, %v970
        %972 = vdwg.mxu0
        %v973 = vmax.f32 %v934, 0.0
        %v974 = vmax.f32 %v936, 0.0
        %v975 = vmax.f32 %v939, 0.0
        %v976 = vmax.f32 %v941, 0.0
        %v977 = vmax.f32 %v944, 0.0
        %v978 = vmax.f32 %v946, 0.0
        %v979 = vmax.f32 %v949, 0.0
        %v980 = vmax.f32 %v951, 0.0
        %v981 = vmax.f32 %v954, 0.0
        %v982 = vmax.f32 %v956, 0.0
        %v983 = vmax.f32 %v959, 0.0
        %v984 = vmax.f32 %v961, 0.0
        %v985 = vmax.f32 %v964, 0.0
        %v986 = vmax.f32 %v966, 0.0
        %v987 = vmax.f32 %v969, 0.0
        %v988 = vmax.f32 %v971, 0.0
        %v989 = vld [vmem:[#allocation4] sm:$0xf]
        %v990 = vld [vmem:[#allocation4 + $0x4] sm:$0xf]
        %v991 = vpack.c.bf16 %v974, %v973
        %v992 = vpack.c.bf16 %v976, %v975
        %v993 = vpack.c.bf16 %v978, %v977
        %v994 = vpack.c.bf16 %v980, %v979
        %v995 = vpack.c.bf16 %v982, %v981
        %v996 = vpack.c.bf16 %v984, %v983
        %v997 = vpack.c.bf16 %v986, %v985
        %v998 = vpack.c.bf16 %v988, %v987
        %v1001 = vunpack.c.l.b16 %v989
        %v1002 = vunpack.c.l.b16 %v990
        %v1003 = vpack.c.b16 %v1002, %v1001
        %1005 = vmatpush.bf16.msra.mxu0 %v998
        %1006 = vmatpush.bf16.msra.mxu0 %v997
        %1007 = vmatpush.bf16.msra.mxu0 %v996
        %1008 = vmatpush.bf16.msra.mxu0 %v995
        %1009 = vmatpush.bf16.msra.mxu0 %v994
        %1010 = vmatpush.bf16.msra.mxu0 %v993
        %1011 = vmatpush.bf16.msra.mxu0 %v992
        %1012 = vmatpush.bf16.msra.mxu0 %v991
        %1013 = vmatmul.bf16.gmra.mxu0 %v1003
        %v1014 = vpop.f32.mrf.mxu0
        %v1015 = vadd.f32 0.0, %v1014
        %v1016 = vpop.f32.mrf.mxu0
        %v1017 = vadd.f32 0.0, %v1016
        %1018 = vdwg.mxu0
        %v1019 = vld [vmem:[%s632] sm:$0x1]
        %v1021 = vperm.slane %v1019, 0
        %v1023 = vmul.f32 %v1021, %v824
        %v1024 = vmul.f32 %v1021, %v825
        %v1025 = vadd.f32 %v1023, %v1015
        %v1026 = vadd.f32 %v1024, %v1017
        %v1027 = vpack.c.bf16 %v1026, %v1025
        %v1028 = vld [vmem:[%s637] sm:$0xf]
        %v1029 = vld [vmem:[%s637 + $0x4] sm:$0xf]
        %v1030 = vld [vmem:[%s637 + $0x8] sm:$0xf]
        %v1031 = vld [vmem:[%s637 + $0xc] sm:$0xf]
        %v1032 = vld [vmem:[%s637 + $0x10] sm:$0xf]
        %v1033 = vld [vmem:[%s637 + $0x14] sm:$0xf]
        %v1034 = vld [vmem:[%s637 + $0x18] sm:$0xf]
        %v1035 = vld [vmem:[%s637 + $0x1c] sm:$0xf]
        %v1036 = vld [vmem:[%s637 + $0x20] sm:$0xf]
        %v1037 = vld [vmem:[%s637 + $0x24] sm:$0xf]
        %v1038 = vld [vmem:[%s637 + $0x28] sm:$0xf]
        %v1039 = vld [vmem:[%s637 + $0x2c] sm:$0xf]
        %v1040 = vld [vmem:[%s637 + $0x30] sm:$0xf]
        %v1041 = vld [vmem:[%s637 + $0x34] sm:$0xf]
        %v1042 = vld [vmem:[%s637 + $0x38] sm:$0xf]
        %v1043 = vld [vmem:[%s637 + $0x3c] sm:$0xf]
        %v1044 = vld [vmem:[%s640] sm:$0x1]
        %v1046 = vperm.slane %v1044, 0
        %v1064 = vunpack.c.l.b16 %v1028
        %v1065 = vunpack.c.l.b16 %v1029
        %v1066 = vunpack.c.l.b16 %v1030
        %v1067 = vunpack.c.l.b16 %v1031
        %v1068 = vunpack.c.l.b16 %v1032
        %v1069 = vunpack.c.l.b16 %v1033
        %v1070 = vunpack.c.l.b16 %v1034
        %v1071 = vunpack.c.l.b16 %v1035
        %v1072 = vunpack.c.l.b16 %v1036
        %v1073 = vunpack.c.l.b16 %v1037
        %v1074 = vunpack.c.l.b16 %v1038
        %v1075 = vunpack.c.l.b16 %v1039
        %v1076 = vunpack.c.l.b16 %v1040
        %v1077 = vunpack.c.l.b16 %v1041
        %v1078 = vunpack.c.l.b16 %v1042
        %v1079 = vunpack.c.l.b16 %v1043
        %v1080 = vpack.c.b16 %v1065, %v1064
        %v1081 = vpack.c.b16 %v1067, %v1066
        %v1082 = vpack.c.b16 %v1069, %v1068
        %v1083 = vpack.c.b16 %v1071, %v1070
        %v1084 = vpack.c.b16 %v1073, %v1072
        %v1085 = vpack.c.b16 %v1075, %v1074
        %v1086 = vpack.c.b16 %v1077, %v1076
        %v1087 = vpack.c.b16 %v1079, %v1078
        %1096 = vmatpush.bf16.msra.mxu0 %v1087
        %1097 = vmatpush.bf16.msra.mxu0 %v1086
        %1098 = vmatpush.bf16.msra.mxu0 %v1085
        %1099 = vmatpush.bf16.msra.mxu0 %v1084
        %1100 = vmatpush.bf16.msra.mxu0 %v1083
        %1101 = vmatpush.bf16.msra.mxu0 %v1082
        %1102 = vmatpush.bf16.msra.mxu0 %v1081
        %1103 = vmatpush.bf16.msra.mxu0 %v1080
        %1104 = vmatmul.bf16.gmra.mxu0 %v1027
        %v1105 = vpop.f32.mrf.mxu0
        %v1106 = vadd.f32 %v1046, %v1105
        %v1107 = vpop.f32.mrf.mxu0
        %v1108 = vadd.f32 %v1046, %v1107
        %1109 = vdwg.mxu0
        %v1110 = vld [vmem:[%s643] sm:$0x1]
        %v1111 = vld [vmem:[%s646] sm:$0x1]
        %v1112 = vadd.f32 %v1106, %v1108
        %v1113 = vrot.slane %v1112, 4
        %v1114 = vadd.f32 %v1112, %v1113
        %v1115 = vrot.slane %v1114, 2
        %v1116 = vadd.f32 %v1114, %v1115
        %v1117 = vrot.slane %v1116, 1
        %v1118 = vadd.f32 %v1116, %v1117
        %v1119 = vmul.f32 %v1118, 0.0625
        %v1120 = vmul.f32 %v1106, %v1106
        %v1121 = vmul.f32 %v1108, %v1108
        %v1122 = vadd.f32 %v1120, %v1121
        %v1123 = vrot.slane %v1122, 4
        %v1124 = vadd.f32 %v1122, %v1123
        %v1125 = vrot.slane %v1124, 2
        %v1126 = vadd.f32 %v1124, %v1125
        %v1127 = vrot.slane %v1126, 1
        %v1128 = vadd.f32 %v1126, %v1127
        %v1129 = vmul.f32 %v1128, 0.0625
        %v1130 = vmul.f32 %v1119, %v1119
        %v1131 = vsub.f32 %v1129, %v1130
        %v1132 = vsub.f32 %v1106, %v1119
        %v1133 = vsub.f32 %v1108, %v1119
        %v1134 = vadd.f32 %v1131, 1e-05
        %v1135 = vrsqrt.pop %v1134
        %v1136 = vmul.f32 %v1135, %v1134
        %v1137 = vmul.f32 %v1136, %v1135
        %v1138 = vmul.f32 0.5, %v1137
        %v1139 = vsub.f32 1.5, %v1138
        %v1140 = vmul.f32 %v1135, %v1139
        %vm1141 = vweird.f32 %v1134
        %vm1142 = vweird.f32 %v1135
        %vm1143 = vmor %vm1141, %vm1142
        %v1144 = vsel %vm1143, %v1135, %v1140
        %v1145 = vmul.f32 %v1132, %v1144
        %v1146 = vmul.f32 %v1133, %v1144
        %v1148 = vperm.slane %v1110, 0
        %v1150 = vmul.f32 %v1145, %v1148
        %v1151 = vmul.f32 %v1146, %v1148
        %v1153 = vperm.slane %v1111, 0
        %v1155 = vadd.f32 %v1150, %v1153
        %v1156 = vadd.f32 %v1151, %v1153
        %v1157 = vmax.f32 %v1155, 0.0
        %v1158 = vmax.f32 %v1156, 0.0
        %v1159 = vpack.c.bf16 %v1158, %v1157
        %v1160 = vld [vmem:[%s550] sm:$0xf]
        %v1161 = vld [vmem:[%s550 + $0x4] sm:$0xf]
        %v1162 = vld [vmem:[%s550 + $0x8] sm:$0xf]
        %v1163 = vld [vmem:[%s550 + $0xc] sm:$0xf]
        %v1164 = vld [vmem:[%s550 + $0x10] sm:$0xf]
        %v1165 = vld [vmem:[%s550 + $0x14] sm:$0xf]
        %v1166 = vld [vmem:[%s550 + $0x18] sm:$0xf]
        %v1167 = vld [vmem:[%s550 + $0x1c] sm:$0xf]
        %v1168 = vld [vmem:[%s550 + $0x20] sm:$0xf]
        %v1169 = vld [vmem:[%s550 + $0x24] sm:$0xf]
        %v1170 = vld [vmem:[%s550 + $0x28] sm:$0xf]
        %v1171 = vld [vmem:[%s550 + $0x2c] sm:$0xf]
        %v1172 = vld [vmem:[%s550 + $0x30] sm:$0xf]
        %v1173 = vld [vmem:[%s550 + $0x34] sm:$0xf]
        %v1174 = vld [vmem:[%s550 + $0x38] sm:$0xf]
        %v1175 = vld [vmem:[%s550 + $0x3c] sm:$0xf]
        %v1176 = vld [vmem:[%s649] sm:$0x1]
        %v1178 = vperm.slane %v1176, 0
        %v1196 = vunpack.c.l.b16 %v1160
        %v1197 = vunpack.c.l.b16 %v1161
        %v1198 = vunpack.c.l.b16 %v1162
        %v1199 = vunpack.c.l.b16 %v1163
        %v1200 = vunpack.c.l.b16 %v1164
        %v1201 = vunpack.c.l.b16 %v1165
        %v1202 = vunpack.c.l.b16 %v1166
        %v1203 = vunpack.c.l.b16 %v1167
        %v1204 = vunpack.c.l.b16 %v1168
        %v1205 = vunpack.c.l.b16 %v1169
        %v1206 = vunpack.c.l.b16 %v1170
        %v1207 = vunpack.c.l.b16 %v1171
        %v1208 = vunpack.c.l.b16 %v1172
        %v1209 = vunpack.c.l.b16 %v1173
        %v1210 = vunpack.c.l.b16 %v1174
        %v1211 = vunpack.c.l.b16 %v1175
        %v1212 = vpack.c.b16 %v1197, %v1196
        %v1213 = vpack.c.b16 %v1199, %v1198
        %v1214 = vpack.c.b16 %v1201, %v1200
        %v1215 = vpack.c.b16 %v1203, %v1202
        %v1216 = vpack.c.b16 %v1205, %v1204
        %v1217 = vpack.c.b16 %v1207, %v1206
        %v1218 = vpack.c.b16 %v1209, %v1208
        %v1219 = vpack.c.b16 %v1211, %v1210
        %1228 = vmatpush.bf16.msra.mxu0 %v1219
        %1229 = vmatpush.bf16.msra.mxu0 %v1218
        %1230 = vmatpush.bf16.msra.mxu0 %v1217
        %1231 = vmatpush.bf16.msra.mxu0 %v1216
        %1232 = vmatpush.bf16.msra.mxu0 %v1215
        %1233 = vmatpush.bf16.msra.mxu0 %v1214
        %1234 = vmatpush.bf16.msra.mxu0 %v1213
        %1235 = vmatpush.bf16.msra.mxu0 %v1212
        %1236 = vmatmul.bf16.gmra.mxu0 %v1159
        %v1237 = vpop.f32.mrf.mxu0
        %v1238 = vadd.f32 %v1178, %v1237
        %v1239 = vpop.f32.mrf.mxu0
        %v1240 = vadd.f32 %v1178, %v1239
        %1241 = vdwg.mxu0
        %v1242 = vld [vmem:[%s559] sm:$0x1]
        %v1243 = vld [vmem:[%s652] sm:$0x1]
        %v1244 = vadd.f32 %v1238, %v1240
        %v1245 = vrot.slane %v1244, 4
        %v1246 = vadd.f32 %v1244, %v1245
        %v1247 = vrot.slane %v1246, 2
        %v1248 = vadd.f32 %v1246, %v1247
        %v1249 = vrot.slane %v1248, 1
        %v1250 = vadd.f32 %v1248, %v1249
        %v1251 = vmul.f32 %v1250, 0.0625
        %v1252 = vmul.f32 %v1238, %v1238
        %v1253 = vmul.f32 %v1240, %v1240
        %v1254 = vadd.f32 %v1252, %v1253
        %v1255 = vrot.slane %v1254, 4
        %v1256 = vadd.f32 %v1254, %v1255
        %v1257 = vrot.slane %v1256, 2
        %v1258 = vadd.f32 %v1256, %v1257
        %v1259 = vrot.slane %v1258, 1
        %v1260 = vadd.f32 %v1258, %v1259
        %v1261 = vmul.f32 %v1260, 0.0625
        %v1262 = vmul.f32 %v1251, %v1251
        %v1263 = vsub.f32 %v1261, %v1262
        %v1264 = vsub.f32 %v1238, %v1251
        %v1265 = vsub.f32 %v1240, %v1251
        %v1266 = vadd.f32 %v1263, 1e-05
        %v1267 = vrsqrt.pop %v1266
        %v1268 = vmul.f32 %v1267, %v1266
        %v1269 = vmul.f32 %v1268, %v1267
        %v1270 = vmul.f32 0.5, %v1269
        %v1271 = vsub.f32 1.5, %v1270
        %v1272 = vmul.f32 %v1267, %v1271
        %vm1273 = vweird.f32 %v1266
        %vm1274 = vweird.f32 %v1267
        %vm1275 = vmor %vm1273, %vm1274
        %v1276 = vsel %vm1275, %v1267, %v1272
        %v1277 = vmul.f32 %v1264, %v1276
        %v1278 = vmul.f32 %v1265, %v1276
        %v1280 = vperm.slane %v1242, 0
        %v1282 = vmul.f32 %v1277, %v1280
        %v1283 = vmul.f32 %v1278, %v1280
        %v1285 = vperm.slane %v1243, 0
        %v1287 = vadd.f32 %v1282, %v1285
        %v1288 = vadd.f32 %v1283, %v1285
        %p1289 = scmp.ne.s32.totalorder %s27, 1
        // Predicated region
        $region97: #{tpu_custom_call.1} parent=71 // pred_check
          %p1290 = pneg %p1289
        $region98: #{tpu_custom_call.1} parent=71 // pred_check_branch
          %1292 = sbr.rel (%p1290) target = $region100
        $region99: #{tpu_custom_call.1} parent=71 // pred_region
          %v1293 = vmax.f32 %v1287, 0.0
          %v1294 = vmax.f32 %v1288, 0.0
          %1295 = vst [vmem:[#allocation2] sm:$0xff] %v1293
          %1296 = vst [vmem:[#allocation2 + $0x8] sm:$0xff] %v1294
        $region100: #{tpu_custom_call.1} parent=71 // pred_fallthru
          _
        %p1297 = scmp.eq.s32.totalorder %s27, 1
        // Predicated region
        $region101: #{tpu_custom_call.1} parent=71 // pred_check
          %p1298 = pneg %p1297
        $region102: #{tpu_custom_call.1} parent=71 // pred_check_branch
          %1300 = sbr.rel (%p1298) target = $region104
        $region103: #{tpu_custom_call.1} parent=71 // pred_region
          %1301 = vst [vmem:[#allocation13] sm:$0xff] %v1287
          %1302 = vst [vmem:[#allocation13 + $0x8] sm:$0xff] %v1288
        $region104: #{tpu_custom_call.1} parent=71 // pred_fallthru
          _
        // Predicated region
        $region105: #{tpu_custom_call.1} parent=71 // pred_check
          %p1303 = pneg %p363
        $region106: #{tpu_custom_call.1} parent=71 // pred_check_branch
          %1305 = sbr.rel (%p1303) target = $region108
        $region107: #{tpu_custom_call.1} parent=71 // pred_region
          %1307 = vsyncadd [#allocation7], 0
          %s1308 = sshll.u32 [#allocation13], 4
          %s1309 = int_to_ptr.vmem [resolvable:$true] %s1308
          %s1310 = sshll.u32 %s13, 4
          %s1311 = int_to_ptr.hbm [resolvable:$true] %s1310
          %1316 = dma.vmem_to_hbm [thread:$0]  %s1309, 256, %s1311, [#allocation7], 128, 128, 8
        $region108: #{tpu_custom_call.1} parent=71 // pred_fallthru
          _
        // Predicated region
        $region109: #{tpu_custom_call.1} parent=71 // pred_check
          %p1317 = pneg %p363
        $region110: #{tpu_custom_call.1} parent=71 // pred_check_branch
          %1319 = sbr.rel (%p1317) target = $region112
        $region111: #{tpu_custom_call.1} parent=71 // pred_region
          %1321 = dma.done [#allocation7], 256
        $region112: #{tpu_custom_call.1} parent=71 // pred_fallthru
          _
      $region72: #{tpu_custom_call.1} parent=5 // pred_fallthru
        _
      %p1322 = scmp.le.s32.totalorder 2, %s22
      // Predicated region
      $region113: #{tpu_custom_call.1} parent=5 // pred_check
        %p1323 = pneg %p1322
      $region114: #{tpu_custom_call.1} parent=5 // pred_check_branch
        %1325 = sbr.rel (%p1323) target = $region116
      $region115: #{tpu_custom_call.1} parent=5 // pred_region
        %s1326 = ssub.s32 %s22, 2
      $region116: #{tpu_custom_call.1} parent=5 // pred_fallthru
        _
    $region6: #{tpu_custom_call.1} parent=1 // loop_footer
      %s26 = sadd.s32 1, %s22
    $region7: #{tpu_custom_call.1} parent=1 // loop_footer_branch
      %21 = sbr.rel target = $region3
    $region8: #{tpu_custom_call.1} parent=1 // loop_exit
      _
    %1327 = vsyncpa [#allocation6], 1
    %s1328 = scalar_lea.sflag [#allocation6], 1
    %1329 = vsyncpa %s1328, 1
    %1330 = vsyncpa [#allocation9], 1
    %1331 = vsyncpa [#allocation7], 1
    %s1332 = scalar_lea.sflag [#allocation7], 1
    %1333 = vsyncpa %s1332, 1

</llo_original>
